<compile_context>
chip_gen: v7x
topology: tpu7x:2x2x1
jax: 0.10.0
libtpu: 0.0.40
codegen_flags: <defaults>
</compile_context>

<pallas_src>
import math
import functools

import jax
import jax.numpy as jnp
import numpy as np
from jax import lax
from jax.experimental import pallas as pl
from jax.experimental.pallas import tpu as pltpu


def _wdlstm_kernel(gin_ref, whh_ref, out_ref, hn_ref, cn_ref, h_sc, c_sc):
    """One grid step = Tc timesteps of the LSTM recurrence.

    gin_ref : (Tc, 4, B, H) f32  -- precomputed x@W_ih^T + b_ih + b_hh, per gate
    whh_ref : (4, H, H)          -- pre-transposed recurrent weights, whh[g] = W_hh[g].T
    out_ref : (Tc, B, H)
    hn_ref, cn_ref : (1, B, H)   -- written only on the last grid step
    h_sc, c_sc : (B, H) f32 VMEM -- state carried across grid steps
    """
    @pl.when(pl.program_id(0) == 0)
    def _():
        # h0 = None in the PyTorch module -> zero initial state.
        h_sc[...] = jnp.zeros_like(h_sc)
        c_sc[...] = jnp.zeros_like(c_sc)

    # Recurrent weights (pre-transposed, layout-native for the MXU).
    w_i = whh_ref[0]
    w_f = whh_ref[1]
    w_g = whh_ref[2]
    w_o = whh_ref[3]
    mm_dtype = w_i.dtype

    tc = gin_ref.shape[0]

    def step(s, carry):
        h, c = carry                       # (B, H) f32
        gin = gin_ref[s]                   # (4, B, H) f32
        hm = h.astype(mm_dtype)            # bf16 on the fast path, f32 otherwise
        i_g = jax.nn.sigmoid(gin[0] + jnp.dot(hm, w_i, preferred_element_type=jnp.float32))
        f_g = jax.nn.sigmoid(gin[1] + jnp.dot(hm, w_f, preferred_element_type=jnp.float32))
        g_g = jnp.tanh(gin[2] + jnp.dot(hm, w_g, preferred_element_type=jnp.float32))
        o_g = jax.nn.sigmoid(gin[3] + jnp.dot(hm, w_o, preferred_element_type=jnp.float32))
        c_new = f_g * c + i_g * g_g
        h_new = o_g * jnp.tanh(c_new)
        out_ref[s] = h_new.astype(out_ref.dtype)
        return h_new, c_new

    # Unrolled inner loop: LLO scheduler sees all Tc steps at once.
    h_fin, c_fin = lax.fori_loop(0, tc, step, (h_sc[...], c_sc[...]), unroll=True)

    h_sc[...] = h_fin
    c_sc[...] = c_fin

    # Only the final state matters -> write hn/cn once (saves vst slots).
    @pl.when(pl.program_id(0) == pl.num_programs(0) - 1)
    def _():
        hn_ref[0] = h_fin.astype(hn_ref.dtype)
        cn_ref[0] = c_fin.astype(cn_ref.dtype)


@functools.partial(jax.jit, static_argnames=("time_chunk", "matmul_dtype"))
def wdlstm_forward(x, w_ih, w_hh_masked, b_ih, b_hh, *,
                   time_chunk=8, matmul_dtype=jnp.float32):
    """Single-layer LSTM forward with the recurrence in a Pallas kernel.

    x:            (T, B, I) float32
    w_ih:         (4H, I)
    w_hh_masked:  (4H, H)   -- raw_weight_hh_l0 after weight-drop
    b_ih, b_hh:   (4H,)
    returns: output (T, B, H), (hn (1, B, H), cn (1, B, H))
    """
    T, B, I = x.shape
    H = w_hh_masked.shape[1]

    tc = time_chunk if T % time_chunk == 0 else math.gcd(T, time_chunk)
    n_chunks = T // tc

    # (perf) pad batch to a sublane multiple (8 for f32) so stores are dense.
    B_pad = ((B + 7) // 8) * 8
    x_p = jnp.pad(x, ((0, 0), (0, B_pad - B), (0, 0))) if B_pad != B else x

    # (perf) hoist the input projection + (b_ih + b_hh) out of the recurrence:
    # one large parallel matmul instead of T tiny serial MXU calls in-kernel.
    # Shaped (T, 4, B, H) so each gate is its own aligned (B, H) tile.
    wih_g = w_ih.reshape(4, H, I).astype(matmul_dtype)
    bias = (b_ih + b_hh).reshape(4, 1, H).astype(jnp.float32)
    gates_in = jnp.einsum("tbi,ghi->tgbh", x_p.astype(matmul_dtype), wih_g,
                          preferred_element_type=jnp.float32) + bias

    # (perf) pre-transpose recurrent weights per gate: whh_t[g] = W_hh[g].T
    whh_t = jnp.transpose(w_hh_masked.reshape(4, H, H), (0, 2, 1)).astype(matmul_dtype)

    grid_spec = pltpu.PrefetchScalarGridSpec(
        num_scalar_prefetch=0,
        grid=(n_chunks,),
        in_specs=[
            pl.BlockSpec((tc, 4, B_pad, H), lambda t: (t, 0, 0, 0)),   # gates_in chunk
            # W_hh^T resident across all steps.  NOTE: at production sizes
            # (e.g. H~1150) single-buffer this (scratch copy at t==0 or
            # pl.Buffered(1)) to halve weight VMEM on v7x/v5e.
            pl.BlockSpec((4, H, H), lambda t: (0, 0, 0)),
        ],
        out_specs=[
            pl.BlockSpec((tc, B_pad, H), lambda t: (t, 0, 0)),         # output
            pl.BlockSpec((1, B_pad, H), lambda t: (0, 0, 0)),          # hn
            pl.BlockSpec((1, B_pad, H), lambda t: (0, 0, 0)),          # cn
        ],
        scratch_shapes=[
            pltpu.VMEM((B_pad, H), jnp.float32),                       # h carry
            pltpu.VMEM((B_pad, H), jnp.float32),                       # c carry
        ],
    )

    out, hn, cn = pl.pallas_call(
        _wdlstm_kernel,
        out_shape=(
            jax.ShapeDtypeStruct((T, B_pad, H), x.dtype),
            jax.ShapeDtypeStruct((1, B_pad, H), x.dtype),
            jax.ShapeDtypeStruct((1, B_pad, H), x.dtype),
        ),
        grid_spec=grid_spec,
        # Time recurrence is strictly serial.  (On v7x with large B, a leading
        # "parallel" batch-chunk axis would shard the batch across both TCs.)
        compiler_params=pltpu.CompilerParams(dimension_semantics=("arbitrary",)),
    )(gates_in, whh_t)

    if B_pad != B:
        out, hn, cn = out[:, :B], hn[:, :B], cn[:, :B]
    return out, (hn, cn)


def init_wdlstm_params(key, input_size, hidden_size):
    """Matches WDLSTM.init_weights: U(-1/sqrt(H), 1/sqrt(H)), forget bias = 1."""
    bound = 1.0 / math.sqrt(hidden_size)
    k1, k2, k3, k4 = jax.random.split(key, 4)
    w_ih = jax.random.uniform(k1, (4 * hidden_size, input_size),
                              jnp.float32, -bound, bound)
    w_hh = jax.random.uniform(k2, (4 * hidden_size, hidden_size),
                              jnp.float32, -bound, bound)
    b_ih = jax.random.uniform(k3, (4 * hidden_size,), jnp.float32, -bound, bound)
    b_hh = jax.random.uniform(k4, (4 * hidden_size,), jnp.float32, -bound, bound)
    # forget-gate bias (second quarter) set to 1, as in init_weights
    fslice = slice(hidden_size, 2 * hidden_size)
    b_ih = b_ih.at[fslice].set(1.0)
    b_hh = b_hh.at[fslice].set(1.0)
    return w_ih, w_hh, b_ih, b_hh


def apply_weight_drop(key, raw_w_hh, dropout_p, training):
    """nn.functional.dropout on raw_weight_hh_l0 (plain-JAX glue, per-call)."""
    if not training or dropout_p == 0.0:
        return raw_w_hh
    keep = 1.0 - dropout_p
    mask = jax.random.bernoulli(key, keep, raw_w_hh.shape)
    return jnp.where(mask, raw_w_hh / keep, 0.0).astype(raw_w_hh.dtype)


def _reference_lstm(x, w_ih, w_hh, b_ih, b_hh):
    """Pure-JAX reference (lax.scan) mirroring torch.nn.LSTM semantics."""
    T, B, I = x.shape
    H = w_hh.shape[1]
    h0 = jnp.zeros((B, H), jnp.float32)
    c0 = jnp.zeros((B, H), jnp.float32)

    def step(carry, x_t):
        h, c = carry
        gates = x_t @ w_ih.T + h @ w_hh.T + b_ih + b_hh
        i = jax.nn.sigmoid(gates[:, 0 * H:1 * H])
        f = jax.nn.sigmoid(gates[:, 1 * H:2 * H])
        g = jnp.tanh(gates[:, 2 * H:3 * H])
        o = jax.nn.sigmoid(gates[:, 3 * H:4 * H])
        c_new = f * c + i * g
        h_new = o * jnp.tanh(c_new)
        return (h_new, c_new), h_new

    (hn, cn), out = jax.lax.scan(step, (h0, c0), x)
    return out, (hn[None], cn[None])


if __name__ == "__main__":
    # Small shapes consistent with the module's forward.
    T, B, I, H = 8, 2, 16, 32
    dropout_p = 0.3
    training = True   # exercise the weight-drop path (deterministic with fixed key)

    root = jax.random.PRNGKey(0)
    k_param, k_x, k_drop = jax.random.split(root, 3)

    w_ih, raw_w_hh, b_ih, b_hh = init_wdlstm_params(k_param, I, H)
    w_hh = apply_weight_drop(k_drop, raw_w_hh, dropout_p, training)

    x = jax.random.normal(k_x, (T, B, I), jnp.float32)

    # f32 matmul path: tight check against the pure-JAX reference.
    out, (hn, cn) = wdlstm_forward(x, w_ih, w_hh, b_ih, b_hh,
                                   time_chunk=4, matmul_dtype=jnp.float32)
    jax.block_until_ready((out, hn, cn))

    ref_out, (ref_hn, ref_cn) = _reference_lstm(x, w_ih, w_hh, b_ih, b_hh)
    np.testing.assert_allclose(np.asarray(out), np.asarray(ref_out), rtol=2e-5, atol=2e-5)
    np.testing.assert_allclose(np.asarray(hn), np.asarray(ref_hn), rtol=2e-5, atol=2e-5)
    np.testing.assert_allclose(np.asarray(cn), np.asarray(ref_cn), rtol=2e-5, atol=2e-5)

    # bf16 matmul path (production MXU dtype; gate math / cell state stay f32).
    out_bf, (hn_bf, cn_bf) = wdlstm_forward(x, w_ih, w_hh, b_ih, b_hh,
                                            time_chunk=4, matmul_dtype=jnp.bfloat16)
    jax.block_until_ready((out_bf, hn_bf, cn_bf))
    np.testing.assert_allclose(np.asarray(out_bf), np.asarray(ref_out),
                               rtol=5e-2, atol=5e-2)
    np.testing.assert_allclose(np.asarray(hn_bf), np.asarray(ref_hn),
                               rtol=5e-2, atol=5e-2)

    print("KERNEL_OK")
</pallas_src>

<mosaic_0001>
module attributes {stable_mosaic.version = 11 : i64} {
  func.func @_wdlstm_kernel(%arg0: i32, %arg1: memref<4x4x8x32xf32, #tpu.memory_space<vmem>>, %arg2: memref<4x32x32xf32, #tpu.memory_space<vmem>>, %arg3: memref<4x8x32xf32, #tpu.memory_space<vmem>>, %arg4: memref<1x8x32xf32, #tpu.memory_space<vmem>>, %arg5: memref<1x8x32xf32, #tpu.memory_space<vmem>>, %arg6: memref<8x32xf32, #tpu.memory_space<vmem>>, %arg7: memref<8x32xf32, #tpu.memory_space<vmem>>) attributes {dimension_semantics = [#tpu.dimension_semantics<arbitrary>], iteration_bounds = array<i64: 2>, scalar_prefetch = 0 : i64, scratch_operands = 2 : i64, tpu.core_type = #tpu.core_type<tc>, window_params = [{transform_indices = @transform_0, window_bounds = array<i64: 4, 4, 8, 32>}, {pipeline_mode = #tpu.pipeline_mode<synchronous>, transform_indices = @transform_1, window_bounds = array<i64: 4, 32, 32>}, {transform_indices = @transform_2, window_bounds = array<i64: 4, 8, 32>}, {pipeline_mode = #tpu.pipeline_mode<synchronous>, transform_indices = @transform_3, window_bounds = array<i64: 1, 8, 32>}, {pipeline_mode = #tpu.pipeline_mode<synchronous>, transform_indices = @transform_4, window_bounds = array<i64: 1, 8, 32>}]} {
    %c0_i32 = arith.constant 0 : i32
    %0 = arith.cmpi eq, %arg0, %c0_i32 : i32
    %1 = arith.extui %0 : i1 to i32
    %c0_i32_0 = arith.constant 0 : i32
    %2 = arith.cmpi ne, %1, %c0_i32_0 : i32
    scf.if %2 {
      %cst_67 = arith.constant 0.000000e+00 : f32
      %194 = vector.broadcast %cst_67 : f32 to vector<8x32xf32>
      %c0_68 = arith.constant 0 : index
      %c0_69 = arith.constant 0 : index
      %195 = vector.load %arg6[%c0_68, %c0_69] : memref<8x32xf32, #tpu.memory_space<vmem>>, vector<8x32xf32>
      tpu.vector_store %arg6[%c0_68, %c0_69], %194 {strides = array<i32>} : memref<8x32xf32, #tpu.memory_space<vmem>>, vector<8x32xf32>,
      %cst_70 = arith.constant 0.000000e+00 : f32
      %196 = vector.broadcast %cst_70 : f32 to vector<8x32xf32>
      %c0_71 = arith.constant 0 : index
      %c0_72 = arith.constant 0 : index
      %197 = vector.load %arg7[%c0_71, %c0_72] : memref<8x32xf32, #tpu.memory_space<vmem>>, vector<8x32xf32>
      tpu.vector_store %arg7[%c0_71, %c0_72], %196 {strides = array<i32>} : memref<8x32xf32, #tpu.memory_space<vmem>>, vector<8x32xf32>,
    } else {
    }
    %c0 = arith.constant 0 : index
    %c0_1 = arith.constant 0 : index
    %c0_2 = arith.constant 0 : index
    %3 = vector.load %arg2[%c0, %c0_1, %c0_2] : memref<4x32x32xf32, #tpu.memory_space<vmem>>, vector<1x32x32xf32>
    %4 = vector.shape_cast %3 : vector<1x32x32xf32> to vector<32x32xf32>
    %c1 = arith.constant 1 : index
    %c0_3 = arith.constant 0 : index
    %c0_4 = arith.constant 0 : index
    %5 = vector.load %arg2[%c1, %c0_3, %c0_4] : memref<4x32x32xf32, #tpu.memory_space<vmem>>, vector<1x32x32xf32>
    %6 = vector.shape_cast %5 : vector<1x32x32xf32> to vector<32x32xf32>
    %c2 = arith.constant 2 : index
    %c0_5 = arith.constant 0 : index
    %c0_6 = arith.constant 0 : index
    %7 = vector.load %arg2[%c2, %c0_5, %c0_6] : memref<4x32x32xf32, #tpu.memory_space<vmem>>, vector<1x32x32xf32>
    %8 = vector.shape_cast %7 : vector<1x32x32xf32> to vector<32x32xf32>
    %c3 = arith.constant 3 : index
    %c0_7 = arith.constant 0 : index
    %c0_8 = arith.constant 0 : index
    %9 = vector.load %arg2[%c3, %c0_7, %c0_8] : memref<4x32x32xf32, #tpu.memory_space<vmem>>, vector<1x32x32xf32>
    %10 = vector.shape_cast %9 : vector<1x32x32xf32> to vector<32x32xf32>
    %c0_9 = arith.constant 0 : index
    %c0_10 = arith.constant 0 : index
    %11 = vector.load %arg6[%c0_9, %c0_10] : memref<8x32xf32, #tpu.memory_space<vmem>>, vector<8x32xf32>
    %c0_11 = arith.constant 0 : index
    %c0_12 = arith.constant 0 : index
    %12 = vector.load %arg7[%c0_11, %c0_12] : memref<8x32xf32, #tpu.memory_space<vmem>>, vector<8x32xf32>
    %c0_i32_13 = arith.constant 0 : i32
    %13 = arith.index_cast %c0_i32_13 : i32 to index
    %c0_14 = arith.constant 0 : index
    %c0_15 = arith.constant 0 : index
    %c0_16 = arith.constant 0 : index
    %14 = vector.load %arg1[%13, %c0_14, %c0_15, %c0_16] : memref<4x4x8x32xf32, #tpu.memory_space<vmem>>, vector<1x4x8x32xf32>
    %15 = vector.shape_cast %14 : vector<1x4x8x32xf32> to vector<4x8x32xf32>
    %16 = vector.extract_strided_slice %15 {offsets = [0, 0, 0], sizes = [1, 8, 32], strides = [1, 1, 1]} : vector<4x8x32xf32> to vector<1x8x32xf32>
    %17 = vector.shape_cast %16 : vector<1x8x32xf32> to vector<8x32xf32>
    %cst = arith.constant dense<0.000000e+00> : vector<8x32xf32>
    %18 = tpu.matmul %11, %4, %cst {dimension_numbers = #tpu.dot_dimension_numbers<[1], [0], [0], [1], [0, 0, 1, 1], [], []>} : vector<8x32xf32>, vector<32x32xf32>, vector<8x32xf32> -> vector<8x32xf32>
    %19 = arith.addf %17, %18 : vector<8x32xf32>
    %20 = arith.negf %19 : vector<8x32xf32>
    %21 = math.exp %20 : vector<8x32xf32>
    %cst_17 = arith.constant 1.000000e+00 : f32
    %22 = vector.broadcast %cst_17 : f32 to vector<8x32xf32>
    %23 = arith.addf %22, %21 : vector<8x32xf32>
    %24 = arith.divf %22, %23 : vector<8x32xf32>
    %25 = vector.extract_strided_slice %15 {offsets = [1, 0, 0], sizes = [1, 8, 32], strides = [1, 1, 1]} : vector<4x8x32xf32> to vector<1x8x32xf32>
    %26 = vector.shape_cast %25 : vector<1x8x32xf32> to vector<8x32xf32>
    %cst_18 = arith.constant dense<0.000000e+00> : vector<8x32xf32>
    %27 = tpu.matmul %11, %6, %cst_18 {dimension_numbers = #tpu.dot_dimension_numbers<[1], [0], [0], [1], [0, 0, 1, 1], [], []>} : vector<8x32xf32>, vector<32x32xf32>, vector<8x32xf32> -> vector<8x32xf32>
    %28 = arith.addf %26, %27 : vector<8x32xf32>
    %29 = arith.negf %28 : vector<8x32xf32>
    %30 = math.exp %29 : vector<8x32xf32>
    %cst_19 = arith.constant 1.000000e+00 : f32
    %31 = vector.broadcast %cst_19 : f32 to vector<8x32xf32>
    %32 = arith.addf %31, %30 : vector<8x32xf32>
    %33 = arith.divf %31, %32 : vector<8x32xf32>
    %34 = vector.extract_strided_slice %15 {offsets = [2, 0, 0], sizes = [1, 8, 32], strides = [1, 1, 1]} : vector<4x8x32xf32> to vector<1x8x32xf32>
    %35 = vector.shape_cast %34 : vector<1x8x32xf32> to vector<8x32xf32>
    %cst_20 = arith.constant dense<0.000000e+00> : vector<8x32xf32>
    %36 = tpu.matmul %11, %8, %cst_20 {dimension_numbers = #tpu.dot_dimension_numbers<[1], [0], [0], [1], [0, 0, 1, 1], [], []>} : vector<8x32xf32>, vector<32x32xf32>, vector<8x32xf32> -> vector<8x32xf32>
    %37 = arith.addf %35, %36 : vector<8x32xf32>
    %38 = math.tanh %37 : vector<8x32xf32>
    %39 = vector.extract_strided_slice %15 {offsets = [3, 0, 0], sizes = [1, 8, 32], strides = [1, 1, 1]} : vector<4x8x32xf32> to vector<1x8x32xf32>
    %40 = vector.shape_cast %39 : vector<1x8x32xf32> to vector<8x32xf32>
    %cst_21 = arith.constant dense<0.000000e+00> : vector<8x32xf32>
    %41 = tpu.matmul %11, %10, %cst_21 {dimension_numbers = #tpu.dot_dimension_numbers<[1], [0], [0], [1], [0, 0, 1, 1], [], []>} : vector<8x32xf32>, vector<32x32xf32>, vector<8x32xf32> -> vector<8x32xf32>
    %42 = arith.addf %40, %41 : vector<8x32xf32>
    %43 = arith.negf %42 : vector<8x32xf32>
    %44 = math.exp %43 : vector<8x32xf32>
    %cst_22 = arith.constant 1.000000e+00 : f32
    %45 = vector.broadcast %cst_22 : f32 to vector<8x32xf32>
    %46 = arith.addf %45, %44 : vector<8x32xf32>
    %47 = arith.divf %45, %46 : vector<8x32xf32>
    %48 = arith.mulf %33, %12 : vector<8x32xf32>
    %49 = arith.mulf %24, %38 : vector<8x32xf32>
    %50 = arith.addf %48, %49 : vector<8x32xf32>
    %51 = math.tanh %50 : vector<8x32xf32>
    %52 = arith.mulf %47, %51 : vector<8x32xf32>
    %53 = arith.index_cast %c0_i32_13 : i32 to index
    %c0_23 = arith.constant 0 : index
    %c0_24 = arith.constant 0 : index
    %54 = vector.load %arg3[%53, %c0_23, %c0_24] : memref<4x8x32xf32, #tpu.memory_space<vmem>>, vector<1x8x32xf32>
    %55 = vector.shape_cast %54 : vector<1x8x32xf32> to vector<8x32xf32>
    %56 = vector.shape_cast %52 : vector<8x32xf32> to vector<1x8x32xf32>
    tpu.vector_store %arg3[%53, %c0_23, %c0_24], %56 {strides = array<i32>} : memref<4x8x32xf32, #tpu.memory_space<vmem>>, vector<1x8x32xf32>,
    %c1_i32 = arith.constant 1 : i32
    %57 = arith.index_cast %c1_i32 : i32 to index
    %c0_25 = arith.constant 0 : index
    %c0_26 = arith.constant 0 : index
    %c0_27 = arith.constant 0 : index
    %58 = vector.load %arg1[%57, %c0_25, %c0_26, %c0_27] : memref<4x4x8x32xf32, #tpu.memory_space<vmem>>, vector<1x4x8x32xf32>
    %59 = vector.shape_cast %58 : vector<1x4x8x32xf32> to vector<4x8x32xf32>
    %60 = vector.extract_strided_slice %59 {offsets = [0, 0, 0], sizes = [1, 8, 32], strides = [1, 1, 1]} : vector<4x8x32xf32> to vector<1x8x32xf32>
    %61 = vector.shape_cast %60 : vector<1x8x32xf32> to vector<8x32xf32>
    %cst_28 = arith.constant dense<0.000000e+00> : vector<8x32xf32>
    %62 = tpu.matmul %52, %4, %cst_28 {dimension_numbers = #tpu.dot_dimension_numbers<[1], [0], [0], [1], [0, 0, 1, 1], [], []>} : vector<8x32xf32>, vector<32x32xf32>, vector<8x32xf32> -> vector<8x32xf32>
    %63 = arith.addf %61, %62 : vector<8x32xf32>
    %64 = arith.negf %63 : vector<8x32xf32>
    %65 = math.exp %64 : vector<8x32xf32>
    %cst_29 = arith.constant 1.000000e+00 : f32
    %66 = vector.broadcast %cst_29 : f32 to vector<8x32xf32>
    %67 = arith.addf %66, %65 : vector<8x32xf32>
    %68 = arith.divf %66, %67 : vector<8x32xf32>
    %69 = vector.extract_strided_slice %59 {offsets = [1, 0, 0], sizes = [1, 8, 32], strides = [1, 1, 1]} : vector<4x8x32xf32> to vector<1x8x32xf32>
    %70 = vector.shape_cast %69 : vector<1x8x32xf32> to vector<8x32xf32>
    %cst_30 = arith.constant dense<0.000000e+00> : vector<8x32xf32>
    %71 = tpu.matmul %52, %6, %cst_30 {dimension_numbers = #tpu.dot_dimension_numbers<[1], [0], [0], [1], [0, 0, 1, 1], [], []>} : vector<8x32xf32>, vector<32x32xf32>, vector<8x32xf32> -> vector<8x32xf32>
    %72 = arith.addf %70, %71 : vector<8x32xf32>
    %73 = arith.negf %72 : vector<8x32xf32>
    %74 = math.exp %73 : vector<8x32xf32>
    %cst_31 = arith.constant 1.000000e+00 : f32
    %75 = vector.broadcast %cst_31 : f32 to vector<8x32xf32>
    %76 = arith.addf %75, %74 : vector<8x32xf32>
    %77 = arith.divf %75, %76 : vector<8x32xf32>
    %78 = vector.extract_strided_slice %59 {offsets = [2, 0, 0], sizes = [1, 8, 32], strides = [1, 1, 1]} : vector<4x8x32xf32> to vector<1x8x32xf32>
    %79 = vector.shape_cast %78 : vector<1x8x32xf32> to vector<8x32xf32>
    %cst_32 = arith.constant dense<0.000000e+00> : vector<8x32xf32>
    %80 = tpu.matmul %52, %8, %cst_32 {dimension_numbers = #tpu.dot_dimension_numbers<[1], [0], [0], [1], [0, 0, 1, 1], [], []>} : vector<8x32xf32>, vector<32x32xf32>, vector<8x32xf32> -> vector<8x32xf32>
    %81 = arith.addf %79, %80 : vector<8x32xf32>
    %82 = math.tanh %81 : vector<8x32xf32>
    %83 = vector.extract_strided_slice %59 {offsets = [3, 0, 0], sizes = [1, 8, 32], strides = [1, 1, 1]} : vector<4x8x32xf32> to vector<1x8x32xf32>
    %84 = vector.shape_cast %83 : vector<1x8x32xf32> to vector<8x32xf32>
    %cst_33 = arith.constant dense<0.000000e+00> : vector<8x32xf32>
    %85 = tpu.matmul %52, %10, %cst_33 {dimension_numbers = #tpu.dot_dimension_numbers<[1], [0], [0], [1], [0, 0, 1, 1], [], []>} : vector<8x32xf32>, vector<32x32xf32>, vector<8x32xf32> -> vector<8x32xf32>
    %86 = arith.addf %84, %85 : vector<8x32xf32>
    %87 = arith.negf %86 : vector<8x32xf32>
    %88 = math.exp %87 : vector<8x32xf32>
    %cst_34 = arith.constant 1.000000e+00 : f32
    %89 = vector.broadcast %cst_34 : f32 to vector<8x32xf32>
    %90 = arith.addf %89, %88 : vector<8x32xf32>
    %91 = arith.divf %89, %90 : vector<8x32xf32>
    %92 = arith.mulf %77, %50 : vector<8x32xf32>
    %93 = arith.mulf %68, %82 : vector<8x32xf32>
    %94 = arith.addf %92, %93 : vector<8x32xf32>
    %95 = math.tanh %94 : vector<8x32xf32>
    %96 = arith.mulf %91, %95 : vector<8x32xf32>
    %97 = arith.index_cast %c1_i32 : i32 to index
    %c0_35 = arith.constant 0 : index
    %c0_36 = arith.constant 0 : index
    %98 = vector.load %arg3[%97, %c0_35, %c0_36] : memref<4x8x32xf32, #tpu.memory_space<vmem>>, vector<1x8x32xf32>
    %99 = vector.shape_cast %98 : vector<1x8x32xf32> to vector<8x32xf32>
    %100 = vector.shape_cast %96 : vector<8x32xf32> to vector<1x8x32xf32>
    tpu.vector_store %arg3[%97, %c0_35, %c0_36], %100 {strides = array<i32>} : memref<4x8x32xf32, #tpu.memory_space<vmem>>, vector<1x8x32xf32>,
    %c2_i32 = arith.constant 2 : i32
    %101 = arith.index_cast %c2_i32 : i32 to index
    %c0_37 = arith.constant 0 : index
    %c0_38 = arith.constant 0 : index
    %c0_39 = arith.constant 0 : index
    %102 = vector.load %arg1[%101, %c0_37, %c0_38, %c0_39] : memref<4x4x8x32xf32, #tpu.memory_space<vmem>>, vector<1x4x8x32xf32>
    %103 = vector.shape_cast %102 : vector<1x4x8x32xf32> to vector<4x8x32xf32>
    %104 = vector.extract_strided_slice %103 {offsets = [0, 0, 0], sizes = [1, 8, 32], strides = [1, 1, 1]} : vector<4x8x32xf32> to vector<1x8x32xf32>
    %105 = vector.shape_cast %104 : vector<1x8x32xf32> to vector<8x32xf32>
    %cst_40 = arith.constant dense<0.000000e+00> : vector<8x32xf32>
    %106 = tpu.matmul %96, %4, %cst_40 {dimension_numbers = #tpu.dot_dimension_numbers<[1], [0], [0], [1], [0, 0, 1, 1], [], []>} : vector<8x32xf32>, vector<32x32xf32>, vector<8x32xf32> -> vector<8x32xf32>
    %107 = arith.addf %105, %106 : vector<8x32xf32>
    %108 = arith.negf %107 : vector<8x32xf32>
    %109 = math.exp %108 : vector<8x32xf32>
    %cst_41 = arith.constant 1.000000e+00 : f32
    %110 = vector.broadcast %cst_41 : f32 to vector<8x32xf32>
    %111 = arith.addf %110, %109 : vector<8x32xf32>
    %112 = arith.divf %110, %111 : vector<8x32xf32>
    %113 = vector.extract_strided_slice %103 {offsets = [1, 0, 0], sizes = [1, 8, 32], strides = [1, 1, 1]} : vector<4x8x32xf32> to vector<1x8x32xf32>
    %114 = vector.shape_cast %113 : vector<1x8x32xf32> to vector<8x32xf32>
    %cst_42 = arith.constant dense<0.000000e+00> : vector<8x32xf32>
    %115 = tpu.matmul %96, %6, %cst_42 {dimension_numbers = #tpu.dot_dimension_numbers<[1], [0], [0], [1], [0, 0, 1, 1], [], []>} : vector<8x32xf32>, vector<32x32xf32>, vector<8x32xf32> -> vector<8x32xf32>
    %116 = arith.addf %114, %115 : vector<8x32xf32>
    %117 = arith.negf %116 : vector<8x32xf32>
    %118 = math.exp %117 : vector<8x32xf32>
    %cst_43 = arith.constant 1.000000e+00 : f32
    %119 = vector.broadcast %cst_43 : f32 to vector<8x32xf32>
    %120 = arith.addf %119, %118 : vector<8x32xf32>
    %121 = arith.divf %119, %120 : vector<8x32xf32>
    %122 = vector.extract_strided_slice %103 {offsets = [2, 0, 0], sizes = [1, 8, 32], strides = [1, 1, 1]} : vector<4x8x32xf32> to vector<1x8x32xf32>
    %123 = vector.shape_cast %122 : vector<1x8x32xf32> to vector<8x32xf32>
    %cst_44 = arith.constant dense<0.000000e+00> : vector<8x32xf32>
    %124 = tpu.matmul %96, %8, %cst_44 {dimension_numbers = #tpu.dot_dimension_numbers<[1], [0], [0], [1], [0, 0, 1, 1], [], []>} : vector<8x32xf32>, vector<32x32xf32>, vector<8x32xf32> -> vector<8x32xf32>
    %125 = arith.addf %123, %124 : vector<8x32xf32>
    %126 = math.tanh %125 : vector<8x32xf32>
    %127 = vector.extract_strided_slice %103 {offsets = [3, 0, 0], sizes = [1, 8, 32], strides = [1, 1, 1]} : vector<4x8x32xf32> to vector<1x8x32xf32>
    %128 = vector.shape_cast %127 : vector<1x8x32xf32> to vector<8x32xf32>
    %cst_45 = arith.constant dense<0.000000e+00> : vector<8x32xf32>
    %129 = tpu.matmul %96, %10, %cst_45 {dimension_numbers = #tpu.dot_dimension_numbers<[1], [0], [0], [1], [0, 0, 1, 1], [], []>} : vector<8x32xf32>, vector<32x32xf32>, vector<8x32xf32> -> vector<8x32xf32>
    %130 = arith.addf %128, %129 : vector<8x32xf32>
    %131 = arith.negf %130 : vector<8x32xf32>
    %132 = math.exp %131 : vector<8x32xf32>
    %cst_46 = arith.constant 1.000000e+00 : f32
    %133 = vector.broadcast %cst_46 : f32 to vector<8x32xf32>
    %134 = arith.addf %133, %132 : vector<8x32xf32>
    %135 = arith.divf %133, %134 : vector<8x32xf32>
    %136 = arith.mulf %121, %94 : vector<8x32xf32>
    %137 = arith.mulf %112, %126 : vector<8x32xf32>
    %138 = arith.addf %136, %137 : vector<8x32xf32>
    %139 = math.tanh %138 : vector<8x32xf32>
    %140 = arith.mulf %135, %139 : vector<8x32xf32>
    %141 = arith.index_cast %c2_i32 : i32 to index
    %c0_47 = arith.constant 0 : index
    %c0_48 = arith.constant 0 : index
    %142 = vector.load %arg3[%141, %c0_47, %c0_48] : memref<4x8x32xf32, #tpu.memory_space<vmem>>, vector<1x8x32xf32>
    %143 = vector.shape_cast %142 : vector<1x8x32xf32> to vector<8x32xf32>
    %144 = vector.shape_cast %140 : vector<8x32xf32> to vector<1x8x32xf32>
    tpu.vector_store %arg3[%141, %c0_47, %c0_48], %144 {strides = array<i32>} : memref<4x8x32xf32, #tpu.memory_space<vmem>>, vector<1x8x32xf32>,
    %c3_i32 = arith.constant 3 : i32
    %145 = arith.index_cast %c3_i32 : i32 to index
    %c0_49 = arith.constant 0 : index
    %c0_50 = arith.constant 0 : index
    %c0_51 = arith.constant 0 : index
    %146 = vector.load %arg1[%145, %c0_49, %c0_50, %c0_51] : memref<4x4x8x32xf32, #tpu.memory_space<vmem>>, vector<1x4x8x32xf32>
    %147 = vector.shape_cast %146 : vector<1x4x8x32xf32> to vector<4x8x32xf32>
    %148 = vector.extract_strided_slice %147 {offsets = [0, 0, 0], sizes = [1, 8, 32], strides = [1, 1, 1]} : vector<4x8x32xf32> to vector<1x8x32xf32>
    %149 = vector.shape_cast %148 : vector<1x8x32xf32> to vector<8x32xf32>
    %cst_52 = arith.constant dense<0.000000e+00> : vector<8x32xf32>
    %150 = tpu.matmul %140, %4, %cst_52 {dimension_numbers = #tpu.dot_dimension_numbers<[1], [0], [0], [1], [0, 0, 1, 1], [], []>} : vector<8x32xf32>, vector<32x32xf32>, vector<8x32xf32> -> vector<8x32xf32>
    %151 = arith.addf %149, %150 : vector<8x32xf32>
    %152 = arith.negf %151 : vector<8x32xf32>
    %153 = math.exp %152 : vector<8x32xf32>
    %cst_53 = arith.constant 1.000000e+00 : f32
    %154 = vector.broadcast %cst_53 : f32 to vector<8x32xf32>
    %155 = arith.addf %154, %153 : vector<8x32xf32>
    %156 = arith.divf %154, %155 : vector<8x32xf32>
    %157 = vector.extract_strided_slice %147 {offsets = [1, 0, 0], sizes = [1, 8, 32], strides = [1, 1, 1]} : vector<4x8x32xf32> to vector<1x8x32xf32>
    %158 = vector.shape_cast %157 : vector<1x8x32xf32> to vector<8x32xf32>
    %cst_54 = arith.constant dense<0.000000e+00> : vector<8x32xf32>
    %159 = tpu.matmul %140, %6, %cst_54 {dimension_numbers = #tpu.dot_dimension_numbers<[1], [0], [0], [1], [0, 0, 1, 1], [], []>} : vector<8x32xf32>, vector<32x32xf32>, vector<8x32xf32> -> vector<8x32xf32>
    %160 = arith.addf %158, %159 : vector<8x32xf32>
    %161 = arith.negf %160 : vector<8x32xf32>
    %162 = math.exp %161 : vector<8x32xf32>
    %cst_55 = arith.constant 1.000000e+00 : f32
    %163 = vector.broadcast %cst_55 : f32 to vector<8x32xf32>
    %164 = arith.addf %163, %162 : vector<8x32xf32>
    %165 = arith.divf %163, %164 : vector<8x32xf32>
    %166 = vector.extract_strided_slice %147 {offsets = [2, 0, 0], sizes = [1, 8, 32], strides = [1, 1, 1]} : vector<4x8x32xf32> to vector<1x8x32xf32>
    %167 = vector.shape_cast %166 : vector<1x8x32xf32> to vector<8x32xf32>
    %cst_56 = arith.constant dense<0.000000e+00> : vector<8x32xf32>
    %168 = tpu.matmul %140, %8, %cst_56 {dimension_numbers = #tpu.dot_dimension_numbers<[1], [0], [0], [1], [0, 0, 1, 1], [], []>} : vector<8x32xf32>, vector<32x32xf32>, vector<8x32xf32> -> vector<8x32xf32>
    %169 = arith.addf %167, %168 : vector<8x32xf32>
    %170 = math.tanh %169 : vector<8x32xf32>
    %171 = vector.extract_strided_slice %147 {offsets = [3, 0, 0], sizes = [1, 8, 32], strides = [1, 1, 1]} : vector<4x8x32xf32> to vector<1x8x32xf32>
    %172 = vector.shape_cast %171 : vector<1x8x32xf32> to vector<8x32xf32>
    %cst_57 = arith.constant dense<0.000000e+00> : vector<8x32xf32>
    %173 = tpu.matmul %140, %10, %cst_57 {dimension_numbers = #tpu.dot_dimension_numbers<[1], [0], [0], [1], [0, 0, 1, 1], [], []>} : vector<8x32xf32>, vector<32x32xf32>, vector<8x32xf32> -> vector<8x32xf32>
    %174 = arith.addf %172, %173 : vector<8x32xf32>
    %175 = arith.negf %174 : vector<8x32xf32>
    %176 = math.exp %175 : vector<8x32xf32>
    %cst_58 = arith.constant 1.000000e+00 : f32
    %177 = vector.broadcast %cst_58 : f32 to vector<8x32xf32>
    %178 = arith.addf %177, %176 : vector<8x32xf32>
    %179 = arith.divf %177, %178 : vector<8x32xf32>
    %180 = arith.mulf %165, %138 : vector<8x32xf32>
    %181 = arith.mulf %156, %170 : vector<8x32xf32>
    %182 = arith.addf %180, %181 : vector<8x32xf32>
    %183 = math.tanh %182 : vector<8x32xf32>
    %184 = arith.mulf %179, %183 : vector<8x32xf32>
    %185 = arith.index_cast %c3_i32 : i32 to index
    %c0_59 = arith.constant 0 : index
    %c0_60 = arith.constant 0 : index
    %186 = vector.load %arg3[%185, %c0_59, %c0_60] : memref<4x8x32xf32, #tpu.memory_space<vmem>>, vector<1x8x32xf32>
    %187 = vector.shape_cast %186 : vector<1x8x32xf32> to vector<8x32xf32>
    %188 = vector.shape_cast %184 : vector<8x32xf32> to vector<1x8x32xf32>
    tpu.vector_store %arg3[%185, %c0_59, %c0_60], %188 {strides = array<i32>} : memref<4x8x32xf32, #tpu.memory_space<vmem>>, vector<1x8x32xf32>,
    %c4_i32 = arith.constant 4 : i32
    %c0_61 = arith.constant 0 : index
    %c0_62 = arith.constant 0 : index
    %189 = vector.load %arg6[%c0_61, %c0_62] : memref<8x32xf32, #tpu.memory_space<vmem>>, vector<8x32xf32>
    tpu.vector_store %arg6[%c0_61, %c0_62], %184 {strides = array<i32>} : memref<8x32xf32, #tpu.memory_space<vmem>>, vector<8x32xf32>,
    %c0_63 = arith.constant 0 : index
    %c0_64 = arith.constant 0 : index
    %190 = vector.load %arg7[%c0_63, %c0_64] : memref<8x32xf32, #tpu.memory_space<vmem>>, vector<8x32xf32>
    tpu.vector_store %arg7[%c0_63, %c0_64], %182 {strides = array<i32>} : memref<8x32xf32, #tpu.memory_space<vmem>>, vector<8x32xf32>,
    %c1_i32_65 = arith.constant 1 : i32
    %191 = arith.cmpi eq, %arg0, %c1_i32_65 : i32
    %192 = arith.extui %191 : i1 to i32
    %c0_i32_66 = arith.constant 0 : i32
    %193 = arith.cmpi ne, %192, %c0_i32_66 : i32
    scf.if %193 {
      %c0_67 = arith.constant 0 : index
      %c0_68 = arith.constant 0 : index
      %c0_69 = arith.constant 0 : index
      %194 = vector.load %arg4[%c0_67, %c0_68, %c0_69] : memref<1x8x32xf32, #tpu.memory_space<vmem>>, vector<1x8x32xf32>
      %195 = vector.shape_cast %194 : vector<1x8x32xf32> to vector<8x32xf32>
      %196 = vector.shape_cast %184 : vector<8x32xf32> to vector<1x8x32xf32>
      tpu.vector_store %arg4[%c0_67, %c0_68, %c0_69], %196 {strides = array<i32>} : memref<1x8x32xf32, #tpu.memory_space<vmem>>, vector<1x8x32xf32>,
      %c0_70 = arith.constant 0 : index
      %c0_71 = arith.constant 0 : index
      %c0_72 = arith.constant 0 : index
      %197 = vector.load %arg5[%c0_70, %c0_71, %c0_72] : memref<1x8x32xf32, #tpu.memory_space<vmem>>, vector<1x8x32xf32>
      %198 = vector.shape_cast %197 : vector<1x8x32xf32> to vector<8x32xf32>
      %199 = vector.shape_cast %182 : vector<8x32xf32> to vector<1x8x32xf32>
      tpu.vector_store %arg5[%c0_70, %c0_71, %c0_72], %199 {strides = array<i32>} : memref<1x8x32xf32, #tpu.memory_space<vmem>>, vector<1x8x32xf32>,
    } else {
    }
    return
  }
  func.func @transform_0(%arg0: i32) -> (i32, i32, i32, i32) {
    %c0_i32 = arith.constant 0 : i32
    %c0_i32_0 = arith.constant 0 : i32
    %c0_i32_1 = arith.constant 0 : i32
    %c0_i32_2 = arith.constant 0 : i32
    return %arg0, %c0_i32, %c0_i32_0, %c0_i32_1 : i32, i32, i32, i32
  }
  func.func @transform_1(%arg0: i32) -> (i32, i32, i32) {
    %c0_i32 = arith.constant 0 : i32
    %c0_i32_0 = arith.constant 0 : i32
    %c0_i32_1 = arith.constant 0 : i32
    %c0_i32_2 = arith.constant 0 : i32
    return %c0_i32, %c0_i32_0, %c0_i32_1 : i32, i32, i32
  }
  func.func @transform_2(%arg0: i32) -> (i32, i32, i32) {
    %c0_i32 = arith.constant 0 : i32
    %c0_i32_0 = arith.constant 0 : i32
    %c0_i32_1 = arith.constant 0 : i32
    return %arg0, %c0_i32, %c0_i32_0 : i32, i32, i32
  }
  func.func @transform_3(%arg0: i32) -> (i32, i32, i32) {
    %c0_i32 = arith.constant 0 : i32
    %c0_i32_0 = arith.constant 0 : i32
    %c0_i32_1 = arith.constant 0 : i32
    %c0_i32_2 = arith.constant 0 : i32
    return %c0_i32, %c0_i32_0, %c0_i32_1 : i32, i32, i32
  }
  func.func @transform_4(%arg0: i32) -> (i32, i32, i32) {
    %c0_i32 = arith.constant 0 : i32
    %c0_i32_0 = arith.constant 0 : i32
    %c0_i32_1 = arith.constant 0 : i32
    %c0_i32_2 = arith.constant 0 : i32
    return %c0_i32, %c0_i32_0, %c0_i32_1 : i32, i32, i32
  }
}

</mosaic_0001>

<llo_original>
// kernel: wdlstm_forward.1
$region0: #{wdlstm_forward.1}
  #allocation0 [shape = 'u32[]', space=smem, size = 0x4, offset = 0x4, fixed_abs, tag = 'smem constant byte address 0x4 - core index']
  #allocation1 [shape = 'u32[144,128]{1,0:T(1,128)}', space=vmem, size = 0x12000, scoped, tag = 'internal scratch']
  #allocation2 [shape = 'f32[8,32]{1,0:T(8,128)}', space=vmem, size = 0x1000, scoped, tag = 'scratch operand']
  #allocation3 [shape = 'f32[8,32]{1,0:T(8,128)}', space=vmem, size = 0x1000, scoped, tag = 'scratch operand']
  %s0 = inlined_call_operand.vmem [shape: f32[8,4,8,32], index: 0, kind: input, shape index: {}]
  %s1 = inlined_call_operand.vmem [shape: f32[4,32,32], index: 1, kind: input, shape index: {}]
  %s2 = inlined_call_operand.vmem [shape: f32[8,8,32], index: 2, kind: output, shape index: {0}]
  %s3 = inlined_call_operand.vmem [shape: f32[1,8,32], index: 3, kind: output, shape index: {1}]
  %s4 = inlined_call_operand.vmem [shape: f32[1,8,32], index: 4, kind: output, shape index: {2}]
  %5 = xla_tuple %s2, %s3, %s4
  %s6 = sld [smem:[#allocation0]]
  $region65: #{wdlstm_forward.1} parent=0
    _
  %s8 = ssub.s32 1, %s6
  %s9 = scalar_select 0, %s8, %s6
  loop: start=0, step=1, limit=4
  $region2: #{wdlstm_forward.1} parent=0 // loop_pre_header
    _
  $region3: #{wdlstm_forward.1} parent=0 // loop_header
    %s11 = sphi 0, %s15
    %p12 = scmp.ge.s32.totalorder %s11, 4
    %s21 = sphi 0, %s23
    %s24 = sphi 0, %s21
    %s25 = sphi 0, %s24
    %s41 = sphi 0, %s25
    %s45 = sphi 0, %s45
    %s47 = sphi 0, %s45
    %s48 = sphi 0, %s47
    %s62 = sphi 0, %s48
    %s68 = sphi 0, %s70
    %s71 = sphi 0, %s68
    %s72 = sphi 0, %s71
    %s88 = sphi 0, %s72
    %s92 = sphi 0, %s92
    %s94 = sphi 0, %s92
    %s95 = sphi 0, %s94
    %s109 = sphi 0, %s95
    %s113 = sphi 0, %s113
    %s115 = sphi 0, %s113
    %s116 = sphi 0, %s115
    %s130 = sphi 0, %s116
  $region4: #{wdlstm_forward.1} parent=0 // loop_header_branch
    %14 = sbr.rel (%p12) target = $region8
  $region5: #{wdlstm_forward.1} parent=0 // loop_body
    %s16 = ssub.s32 %s11, 1
    %s17 = ssub.s32 %s11, 2
    %s18 = sadd.s32 %s11, 1
    %s19 = ssub.s32 %s11, %s18
    %p20 = scmp.eq.s32.totalorder %s19, 0
    %s22 = sadd.s32 %s21, 1
    %s23 = scalar_select %p20, %s21, %s22
    %p26 = pneg %p20
    %p27 = scmp.eq.s32.totalorder %s11, 1
    %p28 = por %p26, %p27
    %p29 = scmp.ne.s32.totalorder %s21, %s24
    %p30 = scmp.eq.s32.totalorder %s11, 0
    %p31 = por %p29, %p30
    %p32 = scmp.ne.s32.totalorder %s21, %s24
    %p33 = scmp.eq.s32.totalorder %s16, 1
    %p34 = por %p32, %p33
    %p35 = scmp.ne.s32.totalorder %s24, %s25
    %p36 = scmp.eq.s32.totalorder %s16, 0
    %p37 = por %p35, %p36
    %p38 = scmp.ne.s32.totalorder %s24, %s25
    %p39 = scmp.eq.s32.totalorder %s17, 1
    %p40 = por %p38, %p39
    %p42 = scmp.ne.s32.totalorder %s25, %s41
    %p43 = scmp.eq.s32.totalorder %s17, 0
    %p44 = por %p42, %p43
    %s46 = sadd.s32 %s45, 1
    %p49 = scmp.eq.s32.totalorder %s11, 1
    %p50 = scmp.ne.s32.totalorder %s45, %s47
    %p51 = scmp.eq.s32.totalorder %s11, 0
    %p52 = por %p50, %p51
    %p53 = scmp.ne.s32.totalorder %s45, %s47
    %p54 = scmp.eq.s32.totalorder %s16, 1
    %p55 = por %p53, %p54
    %p56 = scmp.ne.s32.totalorder %s47, %s48
    %p57 = scmp.eq.s32.totalorder %s16, 0
    %p58 = por %p56, %p57
    %p59 = scmp.ne.s32.totalorder %s47, %s48
    %p60 = scmp.eq.s32.totalorder %s17, 1
    %p61 = por %p59, %p60
    %p63 = scmp.ne.s32.totalorder %s48, %s62
    %p64 = scmp.eq.s32.totalorder %s17, 0
    %p65 = por %p63, %p64
    %s66 = ssub.s32 %s11, %s18
    %p67 = scmp.eq.s32.totalorder %s66, 0
    %s69 = sadd.s32 %s68, 1
    %s70 = scalar_select %p67, %s68, %s69
    %p73 = pneg %p67
    %p74 = scmp.eq.s32.totalorder %s11, 1
    %p75 = por %p73, %p74
    %p76 = scmp.ne.s32.totalorder %s68, %s71
    %p77 = scmp.eq.s32.totalorder %s11, 0
    %p78 = por %p76, %p77
    %p79 = scmp.ne.s32.totalorder %s68, %s71
    %p80 = scmp.eq.s32.totalorder %s16, 1
    %p81 = por %p79, %p80
    %p82 = scmp.ne.s32.totalorder %s71, %s72
    %p83 = scmp.eq.s32.totalorder %s16, 0
    %p84 = por %p82, %p83
    %p85 = scmp.ne.s32.totalorder %s71, %s72
    %p86 = scmp.eq.s32.totalorder %s17, 1
    %p87 = por %p85, %p86
    %p89 = scmp.ne.s32.totalorder %s72, %s88
    %p90 = scmp.eq.s32.totalorder %s17, 0
    %p91 = por %p89, %p90
    %s93 = sadd.s32 %s92, 1
    %p96 = scmp.eq.s32.totalorder %s11, 1
    %p97 = scmp.ne.s32.totalorder %s92, %s94
    %p98 = scmp.eq.s32.totalorder %s11, 0
    %p99 = por %p97, %p98
    %p100 = scmp.ne.s32.totalorder %s92, %s94
    %p101 = scmp.eq.s32.totalorder %s16, 1
    %p102 = por %p100, %p101
    %p103 = scmp.ne.s32.totalorder %s94, %s95
    %p104 = scmp.eq.s32.totalorder %s16, 0
    %p105 = por %p103, %p104
    %p106 = scmp.ne.s32.totalorder %s94, %s95
    %p107 = scmp.eq.s32.totalorder %s17, 1
    %p108 = por %p106, %p107
    %p110 = scmp.ne.s32.totalorder %s95, %s109
    %p111 = scmp.eq.s32.totalorder %s17, 0
    %p112 = por %p110, %p111
    %s114 = sadd.s32 %s113, 1
    %p117 = scmp.eq.s32.totalorder %s11, 1
    %p118 = scmp.ne.s32.totalorder %s113, %s115
    %p119 = scmp.eq.s32.totalorder %s11, 0
    %p120 = por %p118, %p119
    %p121 = scmp.ne.s32.totalorder %s113, %s115
    %p122 = scmp.eq.s32.totalorder %s16, 1
    %p123 = por %p121, %p122
    %p124 = scmp.ne.s32.totalorder %s115, %s116
    %p125 = scmp.eq.s32.totalorder %s16, 0
    %p126 = por %p124, %p125
    %p127 = scmp.ne.s32.totalorder %s115, %s116
    %p128 = scmp.eq.s32.totalorder %s17, 1
    %p129 = por %p127, %p128
    %p131 = scmp.ne.s32.totalorder %s116, %s130
    %p132 = scmp.eq.s32.totalorder %s17, 0
    %p133 = por %p131, %p132
    %p134 = scmp.le.s32.totalorder 1, %s11
    %p135 = scmp.lt.s32.totalorder %s11, 3
    %p136 = pnand %p134, %p135
    %p137 = pneg %p136
    // Predicated region
    $region9: #{wdlstm_forward.1} parent=5 // pred_check
      _
    $region10: #{wdlstm_forward.1} parent=5 // pred_check_branch
      %139 = sbr.rel (%p136) target = $region12
    $region11: #{wdlstm_forward.1} parent=5 // pred_region
      %s140 = ssub.s32 %s11, 1
      // Predicated region
      $region13: #{wdlstm_forward.1} parent=11 // pred_check
        %p141 = pneg %p58
      $region14: #{wdlstm_forward.1} parent=11 // pred_check_branch
        %143 = sbr.rel (%p141) target = $region16
      $region15: #{wdlstm_forward.1} parent=11 // pred_region
        _
      $region16: #{wdlstm_forward.1} parent=11 // pred_fallthru
        _
    $region12: #{wdlstm_forward.1} parent=5 // pred_fallthru
      _
    %p144 = scmp.lt.s32.totalorder %s11, 2
    // Predicated region
    $region17: #{wdlstm_forward.1} parent=5 // pred_check
      %p145 = pneg %p144
    $region18: #{wdlstm_forward.1} parent=5 // pred_check_branch
      %147 = sbr.rel (%p145) target = $region20
    $region19: #{wdlstm_forward.1} parent=5 // pred_region
      // Predicated region
      $region21: #{wdlstm_forward.1} parent=19 // pred_check
        %p148 = pneg %p31
      $region22: #{wdlstm_forward.1} parent=19 // pred_check_branch
        %150 = sbr.rel (%p148) target = $region24
      $region23: #{wdlstm_forward.1} parent=19 // pred_region
        %s151 = smul.u32 4, %s11
        %p152 = scmp.lt.s32.totalorder %s151, 7
        %s153 = scalar_select %p152, %s151, 7
        %s154 = smul.addr %s153, 4
        %s155 = smul.addr %s154, 8
        %s156 = scalar_lea.vmem %s0, %s155
        %s157 = smul.u32 4, %s11
      $region24: #{wdlstm_forward.1} parent=19 // pred_fallthru
        _
    $region20: #{wdlstm_forward.1} parent=5 // pred_fallthru
      _
    %p158 = scmp.le.s32.totalorder 1, %s11
    %p159 = scmp.lt.s32.totalorder %s11, 3
    %p160 = pnand %p158, %p159
    %p161 = pneg %p160
    // Predicated region
    $region25: #{wdlstm_forward.1} parent=5 // pred_check
      _
    $region26: #{wdlstm_forward.1} parent=5 // pred_check_branch
      %163 = sbr.rel (%p160) target = $region28
    $region27: #{wdlstm_forward.1} parent=5 // pred_region
      %s164 = ssub.s32 %s11, 1
      %s165 = smul.u32 4, %s16
      %p166 = scmp.lt.s32.totalorder %s165, 7
      %s167 = scalar_select %p166, %s165, 7
      %s168 = smul.addr %s167, 4
      %s169 = smul.addr %s168, 8
      %s170 = scalar_lea.vmem %s0, %s169
      %p171 = pneg %p37
      %p172 = pneg %p34
      %p173 = pneg %p58
      %p174 = pneg %p55
      %p175 = pneg %p84
      %p176 = pneg %p81
      %s177 = smul.u32 4, %s16
      %p178 = scmp.lt.s32.totalorder %s177, 7
      %s179 = scalar_select %p178, %s177, 7
      %s180 = smul.addr %s179, 8
      %s181 = scalar_lea.vmem %s2, %s180
      %p182 = pneg %p105
      %p183 = pneg %p102
      %p184 = pneg %p126
      %p185 = pneg %p123
      %s186 = smul.u32 4, %s16
      %p187 = scmp.lt.s32.totalorder %s186, 7
      %s188 = scalar_select %p187, %s186, 7
      %s189 = smul.addr %s188, 4
      %s190 = smul.addr %s189, 8
      %s191 = scalar_lea.vmem %s0, %s190
      %s192 = smul.u32 4, %s16
      %s193 = smul.u32 4, %s16
      %p194 = scmp.lt.s32.totalorder %s193, 7
      %s195 = scalar_select %p194, %s193, 7
      %s196 = smul.addr %s195, 8
      %s197 = scalar_lea.vmem %s2, %s196
      %s198 = smul.u32 4, %s16
      %p199 = scmp.eq.s32.totalorder %s16, 0
      // Predicated region
      $region29: #{wdlstm_forward.1} parent=27 // pred_check
        %p200 = pneg %p199
      $region30: #{wdlstm_forward.1} parent=27 // pred_check_branch
        %202 = sbr.rel (%p200) target = $region32
      $region31: #{wdlstm_forward.1} parent=27 // pred_region
        %vm203 = vcmask 261120
        %204 = vst.msk [vmem:[#allocation2] sm:$0xff] %vm203, 0.0
        %205 = vst.msk [vmem:[#allocation3] sm:$0xff] %vm203, 0.0
      $region32: #{wdlstm_forward.1} parent=27 // pred_fallthru
        _
      %v206 = vld [vmem:[%s1] sm:$0xff]
      %v207 = vld [vmem:[%s1 + $0x8] sm:$0xff]
      %v208 = vld [vmem:[%s1 + $0x10] sm:$0xff]
      %v209 = vld [vmem:[%s1 + $0x18] sm:$0xff]
      %s210 = scalar_lea.vmem %s1, 32
      %v211 = vld [vmem:[%s210] sm:$0xff]
      %v212 = vld [vmem:[%s210 + $0x8] sm:$0xff]
      %v213 = vld [vmem:[%s210 + $0x10] sm:$0xff]
      %v214 = vld [vmem:[%s210 + $0x18] sm:$0xff]
      %s215 = scalar_lea.vmem %s1, 64
      %v216 = vld [vmem:[%s215] sm:$0xff]
      %v217 = vld [vmem:[%s215 + $0x8] sm:$0xff]
      %v218 = vld [vmem:[%s215 + $0x10] sm:$0xff]
      %v219 = vld [vmem:[%s215 + $0x18] sm:$0xff]
      %s220 = scalar_lea.vmem %s1, 96
      %v221 = vld [vmem:[%s220] sm:$0xff]
      %v222 = vld [vmem:[%s220 + $0x8] sm:$0xff]
      %v223 = vld [vmem:[%s220 + $0x10] sm:$0xff]
      %v224 = vld [vmem:[%s220 + $0x18] sm:$0xff]
      %v225 = vld [vmem:[#allocation2] sm:$0xff]
      %v226 = vld [vmem:[#allocation3] sm:$0xff]
      %v227 = vld [vmem:[%s191] sm:$0xff]
      %v228 = vld [vmem:[%s191 + $0x8] sm:$0xff]
      %v229 = vld [vmem:[%s191 + $0x10] sm:$0xff]
      %v230 = vld [vmem:[%s191 + $0x18] sm:$0xff]
      %vm231 = vcmask 261120
      %v233 = vsel %vm231, %v225, 0
      %235 = vmatprep.subr.mxu0 0.0
      %236 = vmatpush1.msra.mxu0 %v206
      %237 = vmatprep.subr.mxu0 0.0
      %238 = vmatpush1.msra.mxu0 %v207
      %239 = vmatprep.subr.mxu0 0.0
      %240 = vmatpush1.msra.mxu0 %v208
      %241 = vmatprep.subr.mxu0 0.0
      %242 = vmatpush1.msra.mxu0 %v209
      %243 = vmatprep.subr.mxu0 0.0
      %244 = vmatpush1.msra.mxu0 0.0
      %245 = vmatprep.subr.mxu0 0.0
      %246 = vmatpush1.msra.mxu0 0.0
      %247 = vmatprep.subr.mxu0 0.0
      %248 = vmatpush1.msra.mxu0 0.0
      %249 = vmatprep.subr.mxu0 0.0
      %250 = vmatpush1.msra.mxu0 0.0
      %251 = vmatprep.subr.mxu0 0.0
      %252 = vmatpush1.msra.mxu0 0.0
      %253 = vmatprep.subr.mxu0 0.0
      %254 = vmatpush1.msra.mxu0 0.0
      %255 = vmatprep.subr.mxu0 0.0
      %256 = vmatpush1.msra.mxu0 0.0
      %257 = vmatprep.subr.mxu0 0.0
      %258 = vmatpush1.msra.mxu0 0.0
      %259 = vmatprep.subr.mxu0 0.0
      %260 = vmatpush1.msra.mxu0 0.0
      %261 = vmatprep.subr.mxu0 0.0
      %262 = vmatpush1.msra.mxu0 0.0
      %263 = vmatprep.subr.mxu0 0.0
      %264 = vmatpush1.msra.mxu0 0.0
      %265 = vmatprep.subr.mxu0 0.0
      %266 = vmatpush1.msra.mxu0 0.0
      %267 = vmatprep.subr.mxu0 0.0
      %268 = vmatpush1.msra.mxu0 0.0
      %269 = vmatprep.subr.mxu0 0.0
      %270 = vmatpush1.msra.mxu0 0.0
      %271 = vmatprep.subr.mxu0 0.0
      %272 = vmatpush1.msra.mxu0 0.0
      %273 = vmatprep.subr.mxu0 0.0
      %274 = vmatpush1.msra.mxu0 0.0
      %275 = vmatprep.subr.mxu0 0.0
      %276 = vmatpush1.msra.mxu0 0.0
      %277 = vmatprep.subr.mxu0 0.0
      %278 = vmatpush1.msra.mxu0 0.0
      %279 = vmatprep.subr.mxu0 0.0
      %280 = vmatpush1.msra.mxu0 0.0
      %281 = vmatprep.subr.mxu0 0.0
      %282 = vmatpush1.msra.mxu0 0.0
      %283 = vmatprep.subr.mxu0 0.0
      %284 = vmatpush1.msra.mxu0 0.0
      %285 = vmatprep.subr.mxu0 0.0
      %286 = vmatpush1.msra.mxu0 0.0
      %287 = vmatprep.subr.mxu0 0.0
      %288 = vmatpush1.msra.mxu0 0.0
      %289 = vmatprep.subr.mxu0 0.0
      %290 = vmatpush1.msra.mxu0 0.0
      %291 = vmatprep.subr.mxu0 0.0
      %292 = vmatpush1.msra.mxu0 0.0
      %293 = vmatprep.subr.mxu0 0.0
      %294 = vmatpush1.msra.mxu0 0.0
      %295 = vmatprep.subr.mxu0 0.0
      %296 = vmatpush1.msra.mxu0 0.0
      %297 = vmatprep.subr.mxu0 0.0
      %298 = vmatpush1.msra.mxu0 0.0
      %299 = vmatprep.mubr.f32.mxu0 0.0
      %300 = vmatmul.mubr.f32.gmra.mrb[0].mxu0 %v233
      %v301 = vpop.f32.mrb[0].mxu0
      %v302 = vadd.f32 0.0, %v301
      %v303 = vpop.f32.mrb[0].mxu0
      %304 = vdwg.mxu0
      %v305 = vadd.f32 %v227, %v302
      %v306 = vxor.u32 %v305, 2147483648
      %v307 = vmul.f32 %v306, 1.442695
      %v308 = vpow.pop %v307
      %v309 = vadd.f32 %v308, 1.0
      %v310 = vrcp.pop %v309
      %v311 = vmul.f32 1.0, %v310
      %312 = vmatprep.subr.mxu0 0.0
      %313 = vmatpush1.msra.mxu0 %v211
      %314 = vmatprep.subr.mxu0 0.0
      %315 = vmatpush1.msra.mxu0 %v212
      %316 = vmatprep.subr.mxu0 0.0
      %317 = vmatpush1.msra.mxu0 %v213
      %318 = vmatprep.subr.mxu0 0.0
      %319 = vmatpush1.msra.mxu0 %v214
      %320 = vmatprep.subr.mxu0 0.0
      %321 = vmatpush1.msra.mxu0 0.0
      %322 = vmatprep.subr.mxu0 0.0
      %323 = vmatpush1.msra.mxu0 0.0
      %324 = vmatprep.subr.mxu0 0.0
      %325 = vmatpush1.msra.mxu0 0.0
      %326 = vmatprep.subr.mxu0 0.0
      %327 = vmatpush1.msra.mxu0 0.0
      %328 = vmatprep.subr.mxu0 0.0
      %329 = vmatpush1.msra.mxu0 0.0
      %330 = vmatprep.subr.mxu0 0.0
      %331 = vmatpush1.msra.mxu0 0.0
      %332 = vmatprep.subr.mxu0 0.0
      %333 = vmatpush1.msra.mxu0 0.0
      %334 = vmatprep.subr.mxu0 0.0
      %335 = vmatpush1.msra.mxu0 0.0
      %336 = vmatprep.subr.mxu0 0.0
      %337 = vmatpush1.msra.mxu0 0.0
      %338 = vmatprep.subr.mxu0 0.0
      %339 = vmatpush1.msra.mxu0 0.0
      %340 = vmatprep.subr.mxu0 0.0
      %341 = vmatpush1.msra.mxu0 0.0
      %342 = vmatprep.subr.mxu0 0.0
      %343 = vmatpush1.msra.mxu0 0.0
      %344 = vmatprep.subr.mxu0 0.0
      %345 = vmatpush1.msra.mxu0 0.0
      %346 = vmatprep.subr.mxu0 0.0
      %347 = vmatpush1.msra.mxu0 0.0
      %348 = vmatprep.subr.mxu0 0.0
      %349 = vmatpush1.msra.mxu0 0.0
      %350 = vmatprep.subr.mxu0 0.0
      %351 = vmatpush1.msra.mxu0 0.0
      %352 = vmatprep.subr.mxu0 0.0
      %353 = vmatpush1.msra.mxu0 0.0
      %354 = vmatprep.subr.mxu0 0.0
      %355 = vmatpush1.msra.mxu0 0.0
      %356 = vmatprep.subr.mxu0 0.0
      %357 = vmatpush1.msra.mxu0 0.0
      %358 = vmatprep.subr.mxu0 0.0
      %359 = vmatpush1.msra.mxu0 0.0
      %360 = vmatprep.subr.mxu0 0.0
      %361 = vmatpush1.msra.mxu0 0.0
      %362 = vmatprep.subr.mxu0 0.0
      %363 = vmatpush1.msra.mxu0 0.0
      %364 = vmatprep.subr.mxu0 0.0
      %365 = vmatpush1.msra.mxu0 0.0
      %366 = vmatprep.subr.mxu0 0.0
      %367 = vmatpush1.msra.mxu0 0.0
      %368 = vmatprep.subr.mxu0 0.0
      %369 = vmatpush1.msra.mxu0 0.0
      %370 = vmatprep.subr.mxu0 0.0
      %371 = vmatpush1.msra.mxu0 0.0
      %372 = vmatprep.subr.mxu0 0.0
      %373 = vmatpush1.msra.mxu0 0.0
      %374 = vmatprep.subr.mxu0 0.0
      %375 = vmatpush1.msra.mxu0 0.0
      %376 = vmatprep.mubr.f32.mxu0 0.0
      %377 = vmatmul.mubr.f32.gmra.mrb[0].mxu0 %v233
      %v378 = vpop.f32.mrb[0].mxu0
      %v379 = vadd.f32 0.0, %v378
      %v380 = vpop.f32.mrb[0].mxu0
      %381 = vdwg.mxu0
      %v382 = vadd.f32 %v228, %v379
      %v383 = vxor.u32 %v382, 2147483648
      %v384 = vmul.f32 %v383, 1.442695
      %v385 = vpow.pop %v384
      %v386 = vadd.f32 %v385, 1.0
      %v387 = vrcp.pop %v386
      %v388 = vmul.f32 1.0, %v387
      %389 = vmatprep.subr.mxu0 0.0
      %390 = vmatpush1.msra.mxu0 %v216
      %391 = vmatprep.subr.mxu0 0.0
      %392 = vmatpush1.msra.mxu0 %v217
      %393 = vmatprep.subr.mxu0 0.0
      %394 = vmatpush1.msra.mxu0 %v218
      %395 = vmatprep.subr.mxu0 0.0
      %396 = vmatpush1.msra.mxu0 %v219
      %397 = vmatprep.subr.mxu0 0.0
      %398 = vmatpush1.msra.mxu0 0.0
      %399 = vmatprep.subr.mxu0 0.0
      %400 = vmatpush1.msra.mxu0 0.0
      %401 = vmatprep.subr.mxu0 0.0
      %402 = vmatpush1.msra.mxu0 0.0
      %403 = vmatprep.subr.mxu0 0.0
      %404 = vmatpush1.msra.mxu0 0.0
      %405 = vmatprep.subr.mxu0 0.0
      %406 = vmatpush1.msra.mxu0 0.0
      %407 = vmatprep.subr.mxu0 0.0
      %408 = vmatpush1.msra.mxu0 0.0
      %409 = vmatprep.subr.mxu0 0.0
      %410 = vmatpush1.msra.mxu0 0.0
      %411 = vmatprep.subr.mxu0 0.0
      %412 = vmatpush1.msra.mxu0 0.0
      %413 = vmatprep.subr.mxu0 0.0
      %414 = vmatpush1.msra.mxu0 0.0
      %415 = vmatprep.subr.mxu0 0.0
      %416 = vmatpush1.msra.mxu0 0.0
      %417 = vmatprep.subr.mxu0 0.0
      %418 = vmatpush1.msra.mxu0 0.0
      %419 = vmatprep.subr.mxu0 0.0
      %420 = vmatpush1.msra.mxu0 0.0
      %421 = vmatprep.subr.mxu0 0.0
      %422 = vmatpush1.msra.mxu0 0.0
      %423 = vmatprep.subr.mxu0 0.0
      %424 = vmatpush1.msra.mxu0 0.0
      %425 = vmatprep.subr.mxu0 0.0
      %426 = vmatpush1.msra.mxu0 0.0
      %427 = vmatprep.subr.mxu0 0.0
      %428 = vmatpush1.msra.mxu0 0.0
      %429 = vmatprep.subr.mxu0 0.0
      %430 = vmatpush1.msra.mxu0 0.0
      %431 = vmatprep.subr.mxu0 0.0
      %432 = vmatpush1.msra.mxu0 0.0
      %433 = vmatprep.subr.mxu0 0.0
      %434 = vmatpush1.msra.mxu0 0.0
      %435 = vmatprep.subr.mxu0 0.0
      %436 = vmatpush1.msra.mxu0 0.0
      %437 = vmatprep.subr.mxu0 0.0
      %438 = vmatpush1.msra.mxu0 0.0
      %439 = vmatprep.subr.mxu0 0.0
      %440 = vmatpush1.msra.mxu0 0.0
      %441 = vmatprep.subr.mxu0 0.0
      %442 = vmatpush1.msra.mxu0 0.0
      %443 = vmatprep.subr.mxu0 0.0
      %444 = vmatpush1.msra.mxu0 0.0
      %445 = vmatprep.subr.mxu0 0.0
      %446 = vmatpush1.msra.mxu0 0.0
      %447 = vmatprep.subr.mxu0 0.0
      %448 = vmatpush1.msra.mxu0 0.0
      %449 = vmatprep.subr.mxu0 0.0
      %450 = vmatpush1.msra.mxu0 0.0
      %451 = vmatprep.subr.mxu0 0.0
      %452 = vmatpush1.msra.mxu0 0.0
      %453 = vmatprep.mubr.f32.mxu0 0.0
      %454 = vmatmul.mubr.f32.gmra.mrb[0].mxu0 %v233
      %v455 = vpop.f32.mrb[0].mxu0
      %v456 = vadd.f32 0.0, %v455
      %v457 = vpop.f32.mrb[0].mxu0
      %458 = vdwg.mxu0
      %v459 = vadd.f32 %v229, %v456
      %v460 = vtanh.pop %v459
      %461 = vmatprep.subr.mxu0 0.0
      %462 = vmatpush1.msra.mxu0 %v221
      %463 = vmatprep.subr.mxu0 0.0
      %464 = vmatpush1.msra.mxu0 %v222
      %465 = vmatprep.subr.mxu0 0.0
      %466 = vmatpush1.msra.mxu0 %v223
      %467 = vmatprep.subr.mxu0 0.0
      %468 = vmatpush1.msra.mxu0 %v224
      %469 = vmatprep.subr.mxu0 0.0
      %470 = vmatpush1.msra.mxu0 0.0
      %471 = vmatprep.subr.mxu0 0.0
      %472 = vmatpush1.msra.mxu0 0.0
      %473 = vmatprep.subr.mxu0 0.0
      %474 = vmatpush1.msra.mxu0 0.0
      %475 = vmatprep.subr.mxu0 0.0
      %476 = vmatpush1.msra.mxu0 0.0
      %477 = vmatprep.subr.mxu0 0.0
      %478 = vmatpush1.msra.mxu0 0.0
      %479 = vmatprep.subr.mxu0 0.0
      %480 = vmatpush1.msra.mxu0 0.0
      %481 = vmatprep.subr.mxu0 0.0
      %482 = vmatpush1.msra.mxu0 0.0
      %483 = vmatprep.subr.mxu0 0.0
      %484 = vmatpush1.msra.mxu0 0.0
      %485 = vmatprep.subr.mxu0 0.0
      %486 = vmatpush1.msra.mxu0 0.0
      %487 = vmatprep.subr.mxu0 0.0
      %488 = vmatpush1.msra.mxu0 0.0
      %489 = vmatprep.subr.mxu0 0.0
      %490 = vmatpush1.msra.mxu0 0.0
      %491 = vmatprep.subr.mxu0 0.0
      %492 = vmatpush1.msra.mxu0 0.0
      %493 = vmatprep.subr.mxu0 0.0
      %494 = vmatpush1.msra.mxu0 0.0
      %495 = vmatprep.subr.mxu0 0.0
      %496 = vmatpush1.msra.mxu0 0.0
      %497 = vmatprep.subr.mxu0 0.0
      %498 = vmatpush1.msra.mxu0 0.0
      %499 = vmatprep.subr.mxu0 0.0
      %500 = vmatpush1.msra.mxu0 0.0
      %501 = vmatprep.subr.mxu0 0.0
      %502 = vmatpush1.msra.mxu0 0.0
      %503 = vmatprep.subr.mxu0 0.0
      %504 = vmatpush1.msra.mxu0 0.0
      %505 = vmatprep.subr.mxu0 0.0
      %506 = vmatpush1.msra.mxu0 0.0
      %507 = vmatprep.subr.mxu0 0.0
      %508 = vmatpush1.msra.mxu0 0.0
      %509 = vmatprep.subr.mxu0 0.0
      %510 = vmatpush1.msra.mxu0 0.0
      %511 = vmatprep.subr.mxu0 0.0
      %512 = vmatpush1.msra.mxu0 0.0
      %513 = vmatprep.subr.mxu0 0.0
      %514 = vmatpush1.msra.mxu0 0.0
      %515 = vmatprep.subr.mxu0 0.0
      %516 = vmatpush1.msra.mxu0 0.0
      %517 = vmatprep.subr.mxu0 0.0
      %518 = vmatpush1.msra.mxu0 0.0
      %519 = vmatprep.subr.mxu0 0.0
      %520 = vmatpush1.msra.mxu0 0.0
      %521 = vmatprep.subr.mxu0 0.0
      %522 = vmatpush1.msra.mxu0 0.0
      %523 = vmatprep.subr.mxu0 0.0
      %524 = vmatpush1.msra.mxu0 0.0
      %525 = vmatprep.mubr.f32.mxu0 0.0
      %526 = vmatmul.mubr.f32.gmra.mrb[0].mxu0 %v233
      %v527 = vpop.f32.mrb[0].mxu0
      %v528 = vadd.f32 0.0, %v527
      %v529 = vpop.f32.mrb[0].mxu0
      %530 = vdwg.mxu0
      %v531 = vadd.f32 %v230, %v528
      %v532 = vxor.u32 %v531, 2147483648
      %v533 = vmul.f32 %v532, 1.442695
      %v534 = vpow.pop %v533
      %v535 = vadd.f32 %v534, 1.0
      %v536 = vrcp.pop %v535
      %v537 = vmul.f32 1.0, %v536
      %v538 = vmul.f32 %v388, %v226
      %v539 = vmul.f32 %v311, %v460
      %v540 = vadd.f32 %v538, %v539
      %v541 = vtanh.pop %v540
      %v542 = vmul.f32 %v537, %v541
      %543 = vst.msk [vmem:[%s197] sm:$0xff] %vm231, %v542
      %s544 = scalar_lea.vmem %s191, 32
      %v545 = vld [vmem:[%s544] sm:$0xff]
      %v546 = vld [vmem:[%s544 + $0x8] sm:$0xff]
      %v547 = vld [vmem:[%s544 + $0x10] sm:$0xff]
      %v548 = vld [vmem:[%s544 + $0x18] sm:$0xff]
      %v550 = vsel %vm231, %v542, 0
      %552 = vmatprep.subr.mxu0 0.0
      %553 = vmatpush1.msra.mxu0 %v206
      %554 = vmatprep.subr.mxu0 0.0
      %555 = vmatpush1.msra.mxu0 %v207
      %556 = vmatprep.subr.mxu0 0.0
      %557 = vmatpush1.msra.mxu0 %v208
      %558 = vmatprep.subr.mxu0 0.0
      %559 = vmatpush1.msra.mxu0 %v209
      %560 = vmatprep.subr.mxu0 0.0
      %561 = vmatpush1.msra.mxu0 0.0
      %562 = vmatprep.subr.mxu0 0.0
      %563 = vmatpush1.msra.mxu0 0.0
      %564 = vmatprep.subr.mxu0 0.0
      %565 = vmatpush1.msra.mxu0 0.0
      %566 = vmatprep.subr.mxu0 0.0
      %567 = vmatpush1.msra.mxu0 0.0
      %568 = vmatprep.subr.mxu0 0.0
      %569 = vmatpush1.msra.mxu0 0.0
      %570 = vmatprep.subr.mxu0 0.0
      %571 = vmatpush1.msra.mxu0 0.0
      %572 = vmatprep.subr.mxu0 0.0
      %573 = vmatpush1.msra.mxu0 0.0
      %574 = vmatprep.subr.mxu0 0.0
      %575 = vmatpush1.msra.mxu0 0.0
      %576 = vmatprep.subr.mxu0 0.0
      %577 = vmatpush1.msra.mxu0 0.0
      %578 = vmatprep.subr.mxu0 0.0
      %579 = vmatpush1.msra.mxu0 0.0
      %580 = vmatprep.subr.mxu0 0.0
      %581 = vmatpush1.msra.mxu0 0.0
      %582 = vmatprep.subr.mxu0 0.0
      %583 = vmatpush1.msra.mxu0 0.0
      %584 = vmatprep.subr.mxu0 0.0
      %585 = vmatpush1.msra.mxu0 0.0
      %586 = vmatprep.subr.mxu0 0.0
      %587 = vmatpush1.msra.mxu0 0.0
      %588 = vmatprep.subr.mxu0 0.0
      %589 = vmatpush1.msra.mxu0 0.0
      %590 = vmatprep.subr.mxu0 0.0
      %591 = vmatpush1.msra.mxu0 0.0
      %592 = vmatprep.subr.mxu0 0.0
      %593 = vmatpush1.msra.mxu0 0.0
      %594 = vmatprep.subr.mxu0 0.0
      %595 = vmatpush1.msra.mxu0 0.0
      %596 = vmatprep.subr.mxu0 0.0
      %597 = vmatpush1.msra.mxu0 0.0
      %598 = vmatprep.subr.mxu0 0.0
      %599 = vmatpush1.msra.mxu0 0.0
      %600 = vmatprep.subr.mxu0 0.0
      %601 = vmatpush1.msra.mxu0 0.0
      %602 = vmatprep.subr.mxu0 0.0
      %603 = vmatpush1.msra.mxu0 0.0
      %604 = vmatprep.subr.mxu0 0.0
      %605 = vmatpush1.msra.mxu0 0.0
      %606 = vmatprep.subr.mxu0 0.0
      %607 = vmatpush1.msra.mxu0 0.0
      %608 = vmatprep.subr.mxu0 0.0
      %609 = vmatpush1.msra.mxu0 0.0
      %610 = vmatprep.subr.mxu0 0.0
      %611 = vmatpush1.msra.mxu0 0.0
      %612 = vmatprep.subr.mxu0 0.0
      %613 = vmatpush1.msra.mxu0 0.0
      %614 = vmatprep.subr.mxu0 0.0
      %615 = vmatpush1.msra.mxu0 0.0
      %616 = vmatprep.mubr.f32.mxu0 0.0
      %617 = vmatmul.mubr.f32.gmra.mrb[0].mxu0 %v550
      %v618 = vpop.f32.mrb[0].mxu0
      %v619 = vadd.f32 0.0, %v618
      %v620 = vpop.f32.mrb[0].mxu0
      %621 = vdwg.mxu0
      %v622 = vadd.f32 %v545, %v619
      %v623 = vxor.u32 %v622, 2147483648
      %v624 = vmul.f32 %v623, 1.442695
      %v625 = vpow.pop %v624
      %v626 = vadd.f32 %v625, 1.0
      %v627 = vrcp.pop %v626
      %v628 = vmul.f32 1.0, %v627
      %629 = vmatprep.subr.mxu0 0.0
      %630 = vmatpush1.msra.mxu0 %v211
      %631 = vmatprep.subr.mxu0 0.0
      %632 = vmatpush1.msra.mxu0 %v212
      %633 = vmatprep.subr.mxu0 0.0
      %634 = vmatpush1.msra.mxu0 %v213
      %635 = vmatprep.subr.mxu0 0.0
      %636 = vmatpush1.msra.mxu0 %v214
      %637 = vmatprep.subr.mxu0 0.0
      %638 = vmatpush1.msra.mxu0 0.0
      %639 = vmatprep.subr.mxu0 0.0
      %640 = vmatpush1.msra.mxu0 0.0
      %641 = vmatprep.subr.mxu0 0.0
      %642 = vmatpush1.msra.mxu0 0.0
      %643 = vmatprep.subr.mxu0 0.0
      %644 = vmatpush1.msra.mxu0 0.0
      %645 = vmatprep.subr.mxu0 0.0
      %646 = vmatpush1.msra.mxu0 0.0
      %647 = vmatprep.subr.mxu0 0.0
      %648 = vmatpush1.msra.mxu0 0.0
      %649 = vmatprep.subr.mxu0 0.0
      %650 = vmatpush1.msra.mxu0 0.0
      %651 = vmatprep.subr.mxu0 0.0
      %652 = vmatpush1.msra.mxu0 0.0
      %653 = vmatprep.subr.mxu0 0.0
      %654 = vmatpush1.msra.mxu0 0.0
      %655 = vmatprep.subr.mxu0 0.0
      %656 = vmatpush1.msra.mxu0 0.0
      %657 = vmatprep.subr.mxu0 0.0
      %658 = vmatpush1.msra.mxu0 0.0
      %659 = vmatprep.subr.mxu0 0.0
      %660 = vmatpush1.msra.mxu0 0.0
      %661 = vmatprep.subr.mxu0 0.0
      %662 = vmatpush1.msra.mxu0 0.0
      %663 = vmatprep.subr.mxu0 0.0
      %664 = vmatpush1.msra.mxu0 0.0
      %665 = vmatprep.subr.mxu0 0.0
      %666 = vmatpush1.msra.mxu0 0.0
      %667 = vmatprep.subr.mxu0 0.0
      %668 = vmatpush1.msra.mxu0 0.0
      %669 = vmatprep.subr.mxu0 0.0
      %670 = vmatpush1.msra.mxu0 0.0
      %671 = vmatprep.subr.mxu0 0.0
      %672 = vmatpush1.msra.mxu0 0.0
      %673 = vmatprep.subr.mxu0 0.0
      %674 = vmatpush1.msra.mxu0 0.0
      %675 = vmatprep.subr.mxu0 0.0
      %676 = vmatpush1.msra.mxu0 0.0
      %677 = vmatprep.subr.mxu0 0.0
      %678 = vmatpush1.msra.mxu0 0.0
      %679 = vmatprep.subr.mxu0 0.0
      %680 = vmatpush1.msra.mxu0 0.0
      %681 = vmatprep.subr.mxu0 0.0
      %682 = vmatpush1.msra.mxu0 0.0
      %683 = vmatprep.subr.mxu0 0.0
      %684 = vmatpush1.msra.mxu0 0.0
      %685 = vmatprep.subr.mxu0 0.0
      %686 = vmatpush1.msra.mxu0 0.0
      %687 = vmatprep.subr.mxu0 0.0
      %688 = vmatpush1.msra.mxu0 0.0
      %689 = vmatprep.subr.mxu0 0.0
      %690 = vmatpush1.msra.mxu0 0.0
      %691 = vmatprep.subr.mxu0 0.0
      %692 = vmatpush1.msra.mxu0 0.0
      %693 = vmatprep.mubr.f32.mxu0 0.0
      %694 = vmatmul.mubr.f32.gmra.mrb[0].mxu0 %v550
      %v695 = vpop.f32.mrb[0].mxu0
      %v696 = vadd.f32 0.0, %v695
      %v697 = vpop.f32.mrb[0].mxu0
      %698 = vdwg.mxu0
      %v699 = vadd.f32 %v546, %v696
      %v700 = vxor.u32 %v699, 2147483648
      %v701 = vmul.f32 %v700, 1.442695
      %v702 = vpow.pop %v701
      %v703 = vadd.f32 %v702, 1.0
      %v704 = vrcp.pop %v703
      %v705 = vmul.f32 1.0, %v704
      %706 = vmatprep.subr.mxu0 0.0
      %707 = vmatpush1.msra.mxu0 %v216
      %708 = vmatprep.subr.mxu0 0.0
      %709 = vmatpush1.msra.mxu0 %v217
      %710 = vmatprep.subr.mxu0 0.0
      %711 = vmatpush1.msra.mxu0 %v218
      %712 = vmatprep.subr.mxu0 0.0
      %713 = vmatpush1.msra.mxu0 %v219
      %714 = vmatprep.subr.mxu0 0.0
      %715 = vmatpush1.msra.mxu0 0.0
      %716 = vmatprep.subr.mxu0 0.0
      %717 = vmatpush1.msra.mxu0 0.0
      %718 = vmatprep.subr.mxu0 0.0
      %719 = vmatpush1.msra.mxu0 0.0
      %720 = vmatprep.subr.mxu0 0.0
      %721 = vmatpush1.msra.mxu0 0.0
      %722 = vmatprep.subr.mxu0 0.0
      %723 = vmatpush1.msra.mxu0 0.0
      %724 = vmatprep.subr.mxu0 0.0
      %725 = vmatpush1.msra.mxu0 0.0
      %726 = vmatprep.subr.mxu0 0.0
      %727 = vmatpush1.msra.mxu0 0.0
      %728 = vmatprep.subr.mxu0 0.0
      %729 = vmatpush1.msra.mxu0 0.0
      %730 = vmatprep.subr.mxu0 0.0
      %731 = vmatpush1.msra.mxu0 0.0
      %732 = vmatprep.subr.mxu0 0.0
      %733 = vmatpush1.msra.mxu0 0.0
      %734 = vmatprep.subr.mxu0 0.0
      %735 = vmatpush1.msra.mxu0 0.0
      %736 = vmatprep.subr.mxu0 0.0
      %737 = vmatpush1.msra.mxu0 0.0
      %738 = vmatprep.subr.mxu0 0.0
      %739 = vmatpush1.msra.mxu0 0.0
      %740 = vmatprep.subr.mxu0 0.0
      %741 = vmatpush1.msra.mxu0 0.0
      %742 = vmatprep.subr.mxu0 0.0
      %743 = vmatpush1.msra.mxu0 0.0
      %744 = vmatprep.subr.mxu0 0.0
      %745 = vmatpush1.msra.mxu0 0.0
      %746 = vmatprep.subr.mxu0 0.0
      %747 = vmatpush1.msra.mxu0 0.0
      %748 = vmatprep.subr.mxu0 0.0
      %749 = vmatpush1.msra.mxu0 0.0
      %750 = vmatprep.subr.mxu0 0.0
      %751 = vmatpush1.msra.mxu0 0.0
      %752 = vmatprep.subr.mxu0 0.0
      %753 = vmatpush1.msra.mxu0 0.0
      %754 = vmatprep.subr.mxu0 0.0
      %755 = vmatpush1.msra.mxu0 0.0
      %756 = vmatprep.subr.mxu0 0.0
      %757 = vmatpush1.msra.mxu0 0.0
      %758 = vmatprep.subr.mxu0 0.0
      %759 = vmatpush1.msra.mxu0 0.0
      %760 = vmatprep.subr.mxu0 0.0
      %761 = vmatpush1.msra.mxu0 0.0
      %762 = vmatprep.subr.mxu0 0.0
      %763 = vmatpush1.msra.mxu0 0.0
      %764 = vmatprep.subr.mxu0 0.0
      %765 = vmatpush1.msra.mxu0 0.0
      %766 = vmatprep.subr.mxu0 0.0
      %767 = vmatpush1.msra.mxu0 0.0
      %768 = vmatprep.subr.mxu0 0.0
      %769 = vmatpush1.msra.mxu0 0.0
      %770 = vmatprep.mubr.f32.mxu0 0.0
      %771 = vmatmul.mubr.f32.gmra.mrb[0].mxu0 %v550
      %v772 = vpop.f32.mrb[0].mxu0
      %v773 = vadd.f32 0.0, %v772
      %v774 = vpop.f32.mrb[0].mxu0
      %775 = vdwg.mxu0
      %v776 = vadd.f32 %v547, %v773
      %v777 = vtanh.pop %v776
      %778 = vmatprep.subr.mxu0 0.0
      %779 = vmatpush1.msra.mxu0 %v221
      %780 = vmatprep.subr.mxu0 0.0
      %781 = vmatpush1.msra.mxu0 %v222
      %782 = vmatprep.subr.mxu0 0.0
      %783 = vmatpush1.msra.mxu0 %v223
      %784 = vmatprep.subr.mxu0 0.0
      %785 = vmatpush1.msra.mxu0 %v224
      %786 = vmatprep.subr.mxu0 0.0
      %787 = vmatpush1.msra.mxu0 0.0
      %788 = vmatprep.subr.mxu0 0.0
      %789 = vmatpush1.msra.mxu0 0.0
      %790 = vmatprep.subr.mxu0 0.0
      %791 = vmatpush1.msra.mxu0 0.0
      %792 = vmatprep.subr.mxu0 0.0
      %793 = vmatpush1.msra.mxu0 0.0
      %794 = vmatprep.subr.mxu0 0.0
      %795 = vmatpush1.msra.mxu0 0.0
      %796 = vmatprep.subr.mxu0 0.0
      %797 = vmatpush1.msra.mxu0 0.0
      %798 = vmatprep.subr.mxu0 0.0
      %799 = vmatpush1.msra.mxu0 0.0
      %800 = vmatprep.subr.mxu0 0.0
      %801 = vmatpush1.msra.mxu0 0.0
      %802 = vmatprep.subr.mxu0 0.0
      %803 = vmatpush1.msra.mxu0 0.0
      %804 = vmatprep.subr.mxu0 0.0
      %805 = vmatpush1.msra.mxu0 0.0
      %806 = vmatprep.subr.mxu0 0.0
      %807 = vmatpush1.msra.mxu0 0.0
      %808 = vmatprep.subr.mxu0 0.0
      %809 = vmatpush1.msra.mxu0 0.0
      %810 = vmatprep.subr.mxu0 0.0
      %811 = vmatpush1.msra.mxu0 0.0
      %812 = vmatprep.subr.mxu0 0.0
      %813 = vmatpush1.msra.mxu0 0.0
      %814 = vmatprep.subr.mxu0 0.0
      %815 = vmatpush1.msra.mxu0 0.0
      %816 = vmatprep.subr.mxu0 0.0
      %817 = vmatpush1.msra.mxu0 0.0
      %818 = vmatprep.subr.mxu0 0.0
      %819 = vmatpush1.msra.mxu0 0.0
      %820 = vmatprep.subr.mxu0 0.0
      %821 = vmatpush1.msra.mxu0 0.0
      %822 = vmatprep.subr.mxu0 0.0
      %823 = vmatpush1.msra.mxu0 0.0
      %824 = vmatprep.subr.mxu0 0.0
      %825 = vmatpush1.msra.mxu0 0.0
      %826 = vmatprep.subr.mxu0 0.0
      %827 = vmatpush1.msra.mxu0 0.0
      %828 = vmatprep.subr.mxu0 0.0
      %829 = vmatpush1.msra.mxu0 0.0
      %830 = vmatprep.subr.mxu0 0.0
      %831 = vmatpush1.msra.mxu0 0.0
      %832 = vmatprep.subr.mxu0 0.0
      %833 = vmatpush1.msra.mxu0 0.0
      %834 = vmatprep.subr.mxu0 0.0
      %835 = vmatpush1.msra.mxu0 0.0
      %836 = vmatprep.subr.mxu0 0.0
      %837 = vmatpush1.msra.mxu0 0.0
      %838 = vmatprep.subr.mxu0 0.0
      %839 = vmatpush1.msra.mxu0 0.0
      %840 = vmatprep.subr.mxu0 0.0
      %841 = vmatpush1.msra.mxu0 0.0
      %842 = vmatprep.mubr.f32.mxu0 0.0
      %843 = vmatmul.mubr.f32.gmra.mrb[0].mxu0 %v550
      %v844 = vpop.f32.mrb[0].mxu0
      %v845 = vadd.f32 0.0, %v844
      %v846 = vpop.f32.mrb[0].mxu0
      %847 = vdwg.mxu0
      %v848 = vadd.f32 %v548, %v845
      %v849 = vxor.u32 %v848, 2147483648
      %v850 = vmul.f32 %v849, 1.442695
      %v851 = vpow.pop %v850
      %v852 = vadd.f32 %v851, 1.0
      %v853 = vrcp.pop %v852
      %v854 = vmul.f32 1.0, %v853
      %v855 = vmul.f32 %v705, %v540
      %v856 = vmul.f32 %v628, %v777
      %v857 = vadd.f32 %v855, %v856
      %v858 = vtanh.pop %v857
      %v859 = vmul.f32 %v854, %v858
      %s860 = scalar_lea.vmem %s197, 8
      %861 = vst.msk [vmem:[%s860] sm:$0xff] %vm231, %v859
      %s862 = scalar_lea.vmem %s191, 64
      %v863 = vld [vmem:[%s862] sm:$0xff]
      %v864 = vld [vmem:[%s862 + $0x8] sm:$0xff]
      %v865 = vld [vmem:[%s862 + $0x10] sm:$0xff]
      %v866 = vld [vmem:[%s862 + $0x18] sm:$0xff]
      %v868 = vsel %vm231, %v859, 0
      %870 = vmatprep.subr.mxu0 0.0
      %871 = vmatpush1.msra.mxu0 %v206
      %872 = vmatprep.subr.mxu0 0.0
      %873 = vmatpush1.msra.mxu0 %v207
      %874 = vmatprep.subr.mxu0 0.0
      %875 = vmatpush1.msra.mxu0 %v208
      %876 = vmatprep.subr.mxu0 0.0
      %877 = vmatpush1.msra.mxu0 %v209
      %878 = vmatprep.subr.mxu0 0.0
      %879 = vmatpush1.msra.mxu0 0.0
      %880 = vmatprep.subr.mxu0 0.0
      %881 = vmatpush1.msra.mxu0 0.0
      %882 = vmatprep.subr.mxu0 0.0
      %883 = vmatpush1.msra.mxu0 0.0
      %884 = vmatprep.subr.mxu0 0.0
      %885 = vmatpush1.msra.mxu0 0.0
      %886 = vmatprep.subr.mxu0 0.0
      %887 = vmatpush1.msra.mxu0 0.0
      %888 = vmatprep.subr.mxu0 0.0
      %889 = vmatpush1.msra.mxu0 0.0
      %890 = vmatprep.subr.mxu0 0.0
      %891 = vmatpush1.msra.mxu0 0.0
      %892 = vmatprep.subr.mxu0 0.0
      %893 = vmatpush1.msra.mxu0 0.0
      %894 = vmatprep.subr.mxu0 0.0
      %895 = vmatpush1.msra.mxu0 0.0
      %896 = vmatprep.subr.mxu0 0.0
      %897 = vmatpush1.msra.mxu0 0.0
      %898 = vmatprep.subr.mxu0 0.0
      %899 = vmatpush1.msra.mxu0 0.0
      %900 = vmatprep.subr.mxu0 0.0
      %901 = vmatpush1.msra.mxu0 0.0
      %902 = vmatprep.subr.mxu0 0.0
      %903 = vmatpush1.msra.mxu0 0.0
      %904 = vmatprep.subr.mxu0 0.0
      %905 = vmatpush1.msra.mxu0 0.0
      %906 = vmatprep.subr.mxu0 0.0
      %907 = vmatpush1.msra.mxu0 0.0
      %908 = vmatprep.subr.mxu0 0.0
      %909 = vmatpush1.msra.mxu0 0.0
      %910 = vmatprep.subr.mxu0 0.0
      %911 = vmatpush1.msra.mxu0 0.0
      %912 = vmatprep.subr.mxu0 0.0
      %913 = vmatpush1.msra.mxu0 0.0
      %914 = vmatprep.subr.mxu0 0.0
      %915 = vmatpush1.msra.mxu0 0.0
      %916 = vmatprep.subr.mxu0 0.0
      %917 = vmatpush1.msra.mxu0 0.0
      %918 = vmatprep.subr.mxu0 0.0
      %919 = vmatpush1.msra.mxu0 0.0
      %920 = vmatprep.subr.mxu0 0.0
      %921 = vmatpush1.msra.mxu0 0.0
      %922 = vmatprep.subr.mxu0 0.0
      %923 = vmatpush1.msra.mxu0 0.0
      %924 = vmatprep.subr.mxu0 0.0
      %925 = vmatpush1.msra.mxu0 0.0
      %926 = vmatprep.subr.mxu0 0.0
      %927 = vmatpush1.msra.mxu0 0.0
      %928 = vmatprep.subr.mxu0 0.0
      %929 = vmatpush1.msra.mxu0 0.0
      %930 = vmatprep.subr.mxu0 0.0
      %931 = vmatpush1.msra.mxu0 0.0
      %932 = vmatprep.subr.mxu0 0.0
      %933 = vmatpush1.msra.mxu0 0.0
      %934 = vmatprep.mubr.f32.mxu0 0.0
      %935 = vmatmul.mubr.f32.gmra.mrb[0].mxu0 %v868
      %v936 = vpop.f32.mrb[0].mxu0
      %v937 = vadd.f32 0.0, %v936
      %v938 = vpop.f32.mrb[0].mxu0
      %939 = vdwg.mxu0
      %v940 = vadd.f32 %v863, %v937
      %v941 = vxor.u32 %v940, 2147483648
      %v942 = vmul.f32 %v941, 1.442695
      %v943 = vpow.pop %v942
      %v944 = vadd.f32 %v943, 1.0
      %v945 = vrcp.pop %v944
      %v946 = vmul.f32 1.0, %v945
      %947 = vmatprep.subr.mxu0 0.0
      %948 = vmatpush1.msra.mxu0 %v211
      %949 = vmatprep.subr.mxu0 0.0
      %950 = vmatpush1.msra.mxu0 %v212
      %951 = vmatprep.subr.mxu0 0.0
      %952 = vmatpush1.msra.mxu0 %v213
      %953 = vmatprep.subr.mxu0 0.0
      %954 = vmatpush1.msra.mxu0 %v214
      %955 = vmatprep.subr.mxu0 0.0
      %956 = vmatpush1.msra.mxu0 0.0
      %957 = vmatprep.subr.mxu0 0.0
      %958 = vmatpush1.msra.mxu0 0.0
      %959 = vmatprep.subr.mxu0 0.0
      %960 = vmatpush1.msra.mxu0 0.0
      %961 = vmatprep.subr.mxu0 0.0
      %962 = vmatpush1.msra.mxu0 0.0
      %963 = vmatprep.subr.mxu0 0.0
      %964 = vmatpush1.msra.mxu0 0.0
      %965 = vmatprep.subr.mxu0 0.0
      %966 = vmatpush1.msra.mxu0 0.0
      %967 = vmatprep.subr.mxu0 0.0
      %968 = vmatpush1.msra.mxu0 0.0
      %969 = vmatprep.subr.mxu0 0.0
      %970 = vmatpush1.msra.mxu0 0.0
      %971 = vmatprep.subr.mxu0 0.0
      %972 = vmatpush1.msra.mxu0 0.0
      %973 = vmatprep.subr.mxu0 0.0
      %974 = vmatpush1.msra.mxu0 0.0
      %975 = vmatprep.subr.mxu0 0.0
      %976 = vmatpush1.msra.mxu0 0.0
      %977 = vmatprep.subr.mxu0 0.0
      %978 = vmatpush1.msra.mxu0 0.0
      %979 = vmatprep.subr.mxu0 0.0
      %980 = vmatpush1.msra.mxu0 0.0
      %981 = vmatprep.subr.mxu0 0.0
      %982 = vmatpush1.msra.mxu0 0.0
      %983 = vmatprep.subr.mxu0 0.0
      %984 = vmatpush1.msra.mxu0 0.0
      %985 = vmatprep.subr.mxu0 0.0
      %986 = vmatpush1.msra.mxu0 0.0
      %987 = vmatprep.subr.mxu0 0.0
      %988 = vmatpush1.msra.mxu0 0.0
      %989 = vmatprep.subr.mxu0 0.0
      %990 = vmatpush1.msra.mxu0 0.0
      %991 = vmatprep.subr.mxu0 0.0
      %992 = vmatpush1.msra.mxu0 0.0
      %993 = vmatprep.subr.mxu0 0.0
      %994 = vmatpush1.msra.mxu0 0.0
      %995 = vmatprep.subr.mxu0 0.0
      %996 = vmatpush1.msra.mxu0 0.0
      %997 = vmatprep.subr.mxu0 0.0
      %998 = vmatpush1.msra.mxu0 0.0
      %999 = vmatprep.subr.mxu0 0.0
      %1000 = vmatpush1.msra.mxu0 0.0
      %1001 = vmatprep.subr.mxu0 0.0
      %1002 = vmatpush1.msra.mxu0 0.0
      %1003 = vmatprep.subr.mxu0 0.0
      %1004 = vmatpush1.msra.mxu0 0.0
      %1005 = vmatprep.subr.mxu0 0.0
      %1006 = vmatpush1.msra.mxu0 0.0
      %1007 = vmatprep.subr.mxu0 0.0
      %1008 = vmatpush1.msra.mxu0 0.0
      %1009 = vmatprep.subr.mxu0 0.0
      %1010 = vmatpush1.msra.mxu0 0.0
      %1011 = vmatprep.mubr.f32.mxu0 0.0
      %1012 = vmatmul.mubr.f32.gmra.mrb[0].mxu0 %v868
      %v1013 = vpop.f32.mrb[0].mxu0
      %v1014 = vadd.f32 0.0, %v1013
      %v1015 = vpop.f32.mrb[0].mxu0
      %1016 = vdwg.mxu0
      %v1017 = vadd.f32 %v864, %v1014
      %v1018 = vxor.u32 %v1017, 2147483648
      %v1019 = vmul.f32 %v1018, 1.442695
      %v1020 = vpow.pop %v1019
      %v1021 = vadd.f32 %v1020, 1.0
      %v1022 = vrcp.pop %v1021
      %v1023 = vmul.f32 1.0, %v1022
      %1024 = vmatprep.subr.mxu0 0.0
      %1025 = vmatpush1.msra.mxu0 %v216
      %1026 = vmatprep.subr.mxu0 0.0
      %1027 = vmatpush1.msra.mxu0 %v217
      %1028 = vmatprep.subr.mxu0 0.0
      %1029 = vmatpush1.msra.mxu0 %v218
      %1030 = vmatprep.subr.mxu0 0.0
      %1031 = vmatpush1.msra.mxu0 %v219
      %1032 = vmatprep.subr.mxu0 0.0
      %1033 = vmatpush1.msra.mxu0 0.0
      %1034 = vmatprep.subr.mxu0 0.0
      %1035 = vmatpush1.msra.mxu0 0.0
      %1036 = vmatprep.subr.mxu0 0.0
      %1037 = vmatpush1.msra.mxu0 0.0
      %1038 = vmatprep.subr.mxu0 0.0
      %1039 = vmatpush1.msra.mxu0 0.0
      %1040 = vmatprep.subr.mxu0 0.0
      %1041 = vmatpush1.msra.mxu0 0.0
      %1042 = vmatprep.subr.mxu0 0.0
      %1043 = vmatpush1.msra.mxu0 0.0
      %1044 = vmatprep.subr.mxu0 0.0
      %1045 = vmatpush1.msra.mxu0 0.0
      %1046 = vmatprep.subr.mxu0 0.0
      %1047 = vmatpush1.msra.mxu0 0.0
      %1048 = vmatprep.subr.mxu0 0.0
      %1049 = vmatpush1.msra.mxu0 0.0
      %1050 = vmatprep.subr.mxu0 0.0
      %1051 = vmatpush1.msra.mxu0 0.0
      %1052 = vmatprep.subr.mxu0 0.0
      %1053 = vmatpush1.msra.mxu0 0.0
      %1054 = vmatprep.subr.mxu0 0.0
      %1055 = vmatpush1.msra.mxu0 0.0
      %1056 = vmatprep.subr.mxu0 0.0
      %1057 = vmatpush1.msra.mxu0 0.0
      %1058 = vmatprep.subr.mxu0 0.0
      %1059 = vmatpush1.msra.mxu0 0.0
      %1060 = vmatprep.subr.mxu0 0.0
      %1061 = vmatpush1.msra.mxu0 0.0
      %1062 = vmatprep.subr.mxu0 0.0
      %1063 = vmatpush1.msra.mxu0 0.0
      %1064 = vmatprep.subr.mxu0 0.0
      %1065 = vmatpush1.msra.mxu0 0.0
      %1066 = vmatprep.subr.mxu0 0.0
      %1067 = vmatpush1.msra.mxu0 0.0
      %1068 = vmatprep.subr.mxu0 0.0
      %1069 = vmatpush1.msra.mxu0 0.0
      %1070 = vmatprep.subr.mxu0 0.0
      %1071 = vmatpush1.msra.mxu0 0.0
      %1072 = vmatprep.subr.mxu0 0.0
      %1073 = vmatpush1.msra.mxu0 0.0
      %1074 = vmatprep.subr.mxu0 0.0
      %1075 = vmatpush1.msra.mxu0 0.0
      %1076 = vmatprep.subr.mxu0 0.0
      %1077 = vmatpush1.msra.mxu0 0.0
      %1078 = vmatprep.subr.mxu0 0.0
      %1079 = vmatpush1.msra.mxu0 0.0
      %1080 = vmatprep.subr.mxu0 0.0
      %1081 = vmatpush1.msra.mxu0 0.0
      %1082 = vmatprep.subr.mxu0 0.0
      %1083 = vmatpush1.msra.mxu0 0.0
      %1084 = vmatprep.subr.mxu0 0.0
      %1085 = vmatpush1.msra.mxu0 0.0
      %1086 = vmatprep.subr.mxu0 0.0
      %1087 = vmatpush1.msra.mxu0 0.0
      %1088 = vmatprep.mubr.f32.mxu0 0.0
      %1089 = vmatmul.mubr.f32.gmra.mrb[0].mxu0 %v868
      %v1090 = vpop.f32.mrb[0].mxu0
      %v1091 = vadd.f32 0.0, %v1090
      %v1092 = vpop.f32.mrb[0].mxu0
      %1093 = vdwg.mxu0
      %v1094 = vadd.f32 %v865, %v1091
      %v1095 = vtanh.pop %v1094
      %1096 = vmatprep.subr.mxu0 0.0
      %1097 = vmatpush1.msra.mxu0 %v221
      %1098 = vmatprep.subr.mxu0 0.0
      %1099 = vmatpush1.msra.mxu0 %v222
      %1100 = vmatprep.subr.mxu0 0.0
      %1101 = vmatpush1.msra.mxu0 %v223
      %1102 = vmatprep.subr.mxu0 0.0
      %1103 = vmatpush1.msra.mxu0 %v224
      %1104 = vmatprep.subr.mxu0 0.0
      %1105 = vmatpush1.msra.mxu0 0.0
      %1106 = vmatprep.subr.mxu0 0.0
      %1107 = vmatpush1.msra.mxu0 0.0
      %1108 = vmatprep.subr.mxu0 0.0
      %1109 = vmatpush1.msra.mxu0 0.0
      %1110 = vmatprep.subr.mxu0 0.0
      %1111 = vmatpush1.msra.mxu0 0.0
      %1112 = vmatprep.subr.mxu0 0.0
      %1113 = vmatpush1.msra.mxu0 0.0
      %1114 = vmatprep.subr.mxu0 0.0
      %1115 = vmatpush1.msra.mxu0 0.0
      %1116 = vmatprep.subr.mxu0 0.0
      %1117 = vmatpush1.msra.mxu0 0.0
      %1118 = vmatprep.subr.mxu0 0.0
      %1119 = vmatpush1.msra.mxu0 0.0
      %1120 = vmatprep.subr.mxu0 0.0
      %1121 = vmatpush1.msra.mxu0 0.0
      %1122 = vmatprep.subr.mxu0 0.0
      %1123 = vmatpush1.msra.mxu0 0.0
      %1124 = vmatprep.subr.mxu0 0.0
      %1125 = vmatpush1.msra.mxu0 0.0
      %1126 = vmatprep.subr.mxu0 0.0
      %1127 = vmatpush1.msra.mxu0 0.0
      %1128 = vmatprep.subr.mxu0 0.0
      %1129 = vmatpush1.msra.mxu0 0.0
      %1130 = vmatprep.subr.mxu0 0.0
      %1131 = vmatpush1.msra.mxu0 0.0
      %1132 = vmatprep.subr.mxu0 0.0
      %1133 = vmatpush1.msra.mxu0 0.0
      %1134 = vmatprep.subr.mxu0 0.0
      %1135 = vmatpush1.msra.mxu0 0.0
      %1136 = vmatprep.subr.mxu0 0.0
      %1137 = vmatpush1.msra.mxu0 0.0
      %1138 = vmatprep.subr.mxu0 0.0
      %1139 = vmatpush1.msra.mxu0 0.0
      %1140 = vmatprep.subr.mxu0 0.0
      %1141 = vmatpush1.msra.mxu0 0.0
      %1142 = vmatprep.subr.mxu0 0.0
      %1143 = vmatpush1.msra.mxu0 0.0
      %1144 = vmatprep.subr.mxu0 0.0
      %1145 = vmatpush1.msra.mxu0 0.0
      %1146 = vmatprep.subr.mxu0 0.0
      %1147 = vmatpush1.msra.mxu0 0.0
      %1148 = vmatprep.subr.mxu0 0.0
      %1149 = vmatpush1.msra.mxu0 0.0
      %1150 = vmatprep.subr.mxu0 0.0
      %1151 = vmatpush1.msra.mxu0 0.0
      %1152 = vmatprep.subr.mxu0 0.0
      %1153 = vmatpush1.msra.mxu0 0.0
      %1154 = vmatprep.subr.mxu0 0.0
      %1155 = vmatpush1.msra.mxu0 0.0
      %1156 = vmatprep.subr.mxu0 0.0
      %1157 = vmatpush1.msra.mxu0 0.0
      %1158 = vmatprep.subr.mxu0 0.0
      %1159 = vmatpush1.msra.mxu0 0.0
      %1160 = vmatprep.mubr.f32.mxu0 0.0
      %1161 = vmatmul.mubr.f32.gmra.mrb[0].mxu0 %v868
      %v1162 = vpop.f32.mrb[0].mxu0
      %v1163 = vadd.f32 0.0, %v1162
      %v1164 = vpop.f32.mrb[0].mxu0
      %1165 = vdwg.mxu0
      %v1166 = vadd.f32 %v866, %v1163
      %v1167 = vxor.u32 %v1166, 2147483648
      %v1168 = vmul.f32 %v1167, 1.442695
      %v1169 = vpow.pop %v1168
      %v1170 = vadd.f32 %v1169, 1.0
      %v1171 = vrcp.pop %v1170
      %v1172 = vmul.f32 1.0, %v1171
      %v1173 = vmul.f32 %v1023, %v857
      %v1174 = vmul.f32 %v946, %v1095
      %v1175 = vadd.f32 %v1173, %v1174
      %v1176 = vtanh.pop %v1175
      %v1177 = vmul.f32 %v1172, %v1176
      %s1178 = scalar_lea.vmem %s197, 16
      %1179 = vst.msk [vmem:[%s1178] sm:$0xff] %vm231, %v1177
      %s1180 = scalar_lea.vmem %s191, 96
      %v1181 = vld [vmem:[%s1180] sm:$0xff]
      %v1182 = vld [vmem:[%s1180 + $0x8] sm:$0xff]
      %v1183 = vld [vmem:[%s1180 + $0x10] sm:$0xff]
      %v1184 = vld [vmem:[%s1180 + $0x18] sm:$0xff]
      %v1186 = vsel %vm231, %v1177, 0
      %1188 = vmatprep.subr.mxu0 0.0
      %1189 = vmatpush1.msra.mxu0 %v206
      %1190 = vmatprep.subr.mxu0 0.0
      %1191 = vmatpush1.msra.mxu0 %v207
      %1192 = vmatprep.subr.mxu0 0.0
      %1193 = vmatpush1.msra.mxu0 %v208
      %1194 = vmatprep.subr.mxu0 0.0
      %1195 = vmatpush1.msra.mxu0 %v209
      %1196 = vmatprep.subr.mxu0 0.0
      %1197 = vmatpush1.msra.mxu0 0.0
      %1198 = vmatprep.subr.mxu0 0.0
      %1199 = vmatpush1.msra.mxu0 0.0
      %1200 = vmatprep.subr.mxu0 0.0
      %1201 = vmatpush1.msra.mxu0 0.0
      %1202 = vmatprep.subr.mxu0 0.0
      %1203 = vmatpush1.msra.mxu0 0.0
      %1204 = vmatprep.subr.mxu0 0.0
      %1205 = vmatpush1.msra.mxu0 0.0
      %1206 = vmatprep.subr.mxu0 0.0
      %1207 = vmatpush1.msra.mxu0 0.0
      %1208 = vmatprep.subr.mxu0 0.0
      %1209 = vmatpush1.msra.mxu0 0.0
      %1210 = vmatprep.subr.mxu0 0.0
      %1211 = vmatpush1.msra.mxu0 0.0
      %1212 = vmatprep.subr.mxu0 0.0
      %1213 = vmatpush1.msra.mxu0 0.0
      %1214 = vmatprep.subr.mxu0 0.0
      %1215 = vmatpush1.msra.mxu0 0.0
      %1216 = vmatprep.subr.mxu0 0.0
      %1217 = vmatpush1.msra.mxu0 0.0
      %1218 = vmatprep.subr.mxu0 0.0
      %1219 = vmatpush1.msra.mxu0 0.0
      %1220 = vmatprep.subr.mxu0 0.0
      %1221 = vmatpush1.msra.mxu0 0.0
      %1222 = vmatprep.subr.mxu0 0.0
      %1223 = vmatpush1.msra.mxu0 0.0
      %1224 = vmatprep.subr.mxu0 0.0
      %1225 = vmatpush1.msra.mxu0 0.0
      %1226 = vmatprep.subr.mxu0 0.0
      %1227 = vmatpush1.msra.mxu0 0.0
      %1228 = vmatprep.subr.mxu0 0.0
      %1229 = vmatpush1.msra.mxu0 0.0
      %1230 = vmatprep.subr.mxu0 0.0
      %1231 = vmatpush1.msra.mxu0 0.0
      %1232 = vmatprep.subr.mxu0 0.0
      %1233 = vmatpush1.msra.mxu0 0.0
      %1234 = vmatprep.subr.mxu0 0.0
      %1235 = vmatpush1.msra.mxu0 0.0
      %1236 = vmatprep.subr.mxu0 0.0
      %1237 = vmatpush1.msra.mxu0 0.0
      %1238 = vmatprep.subr.mxu0 0.0
      %1239 = vmatpush1.msra.mxu0 0.0
      %1240 = vmatprep.subr.mxu0 0.0
      %1241 = vmatpush1.msra.mxu0 0.0
      %1242 = vmatprep.subr.mxu0 0.0
      %1243 = vmatpush1.msra.mxu0 0.0
      %1244 = vmatprep.subr.mxu0 0.0
      %1245 = vmatpush1.msra.mxu0 0.0
      %1246 = vmatprep.subr.mxu0 0.0
      %1247 = vmatpush1.msra.mxu0 0.0
      %1248 = vmatprep.subr.mxu0 0.0
      %1249 = vmatpush1.msra.mxu0 0.0
      %1250 = vmatprep.subr.mxu0 0.0
      %1251 = vmatpush1.msra.mxu0 0.0
      %1252 = vmatprep.mubr.f32.mxu0 0.0
      %1253 = vmatmul.mubr.f32.gmra.mrb[0].mxu0 %v1186
      %v1254 = vpop.f32.mrb[0].mxu0
      %v1255 = vadd.f32 0.0, %v1254
      %v1256 = vpop.f32.mrb[0].mxu0
      %1257 = vdwg.mxu0
      %v1258 = vadd.f32 %v1181, %v1255
      %v1259 = vxor.u32 %v1258, 2147483648
      %v1260 = vmul.f32 %v1259, 1.442695
      %v1261 = vpow.pop %v1260
      %v1262 = vadd.f32 %v1261, 1.0
      %v1263 = vrcp.pop %v1262
      %v1264 = vmul.f32 1.0, %v1263
      %1265 = vmatprep.subr.mxu0 0.0
      %1266 = vmatpush1.msra.mxu0 %v211
      %1267 = vmatprep.subr.mxu0 0.0
      %1268 = vmatpush1.msra.mxu0 %v212
      %1269 = vmatprep.subr.mxu0 0.0
      %1270 = vmatpush1.msra.mxu0 %v213
      %1271 = vmatprep.subr.mxu0 0.0
      %1272 = vmatpush1.msra.mxu0 %v214
      %1273 = vmatprep.subr.mxu0 0.0
      %1274 = vmatpush1.msra.mxu0 0.0
      %1275 = vmatprep.subr.mxu0 0.0
      %1276 = vmatpush1.msra.mxu0 0.0
      %1277 = vmatprep.subr.mxu0 0.0
      %1278 = vmatpush1.msra.mxu0 0.0
      %1279 = vmatprep.subr.mxu0 0.0
      %1280 = vmatpush1.msra.mxu0 0.0
      %1281 = vmatprep.subr.mxu0 0.0
      %1282 = vmatpush1.msra.mxu0 0.0
      %1283 = vmatprep.subr.mxu0 0.0
      %1284 = vmatpush1.msra.mxu0 0.0
      %1285 = vmatprep.subr.mxu0 0.0
      %1286 = vmatpush1.msra.mxu0 0.0
      %1287 = vmatprep.subr.mxu0 0.0
      %1288 = vmatpush1.msra.mxu0 0.0
      %1289 = vmatprep.subr.mxu0 0.0
      %1290 = vmatpush1.msra.mxu0 0.0
      %1291 = vmatprep.subr.mxu0 0.0
      %1292 = vmatpush1.msra.mxu0 0.0
      %1293 = vmatprep.subr.mxu0 0.0
      %1294 = vmatpush1.msra.mxu0 0.0
      %1295 = vmatprep.subr.mxu0 0.0
      %1296 = vmatpush1.msra.mxu0 0.0
      %1297 = vmatprep.subr.mxu0 0.0
      %1298 = vmatpush1.msra.mxu0 0.0
      %1299 = vmatprep.subr.mxu0 0.0
      %1300 = vmatpush1.msra.mxu0 0.0
      %1301 = vmatprep.subr.mxu0 0.0
      %1302 = vmatpush1.msra.mxu0 0.0
      %1303 = vmatprep.subr.mxu0 0.0
      %1304 = vmatpush1.msra.mxu0 0.0
      %1305 = vmatprep.subr.mxu0 0.0
      %1306 = vmatpush1.msra.mxu0 0.0
      %1307 = vmatprep.subr.mxu0 0.0
      %1308 = vmatpush1.msra.mxu0 0.0
      %1309 = vmatprep.subr.mxu0 0.0
      %1310 = vmatpush1.msra.mxu0 0.0
      %1311 = vmatprep.subr.mxu0 0.0
      %1312 = vmatpush1.msra.mxu0 0.0
      %1313 = vmatprep.subr.mxu0 0.0
      %1314 = vmatpush1.msra.mxu0 0.0
      %1315 = vmatprep.subr.mxu0 0.0
      %1316 = vmatpush1.msra.mxu0 0.0
      %1317 = vmatprep.subr.mxu0 0.0
      %1318 = vmatpush1.msra.mxu0 0.0
      %1319 = vmatprep.subr.mxu0 0.0
      %1320 = vmatpush1.msra.mxu0 0.0
      %1321 = vmatprep.subr.mxu0 0.0
      %1322 = vmatpush1.msra.mxu0 0.0
      %1323 = vmatprep.subr.mxu0 0.0
      %1324 = vmatpush1.msra.mxu0 0.0
      %1325 = vmatprep.subr.mxu0 0.0
      %1326 = vmatpush1.msra.mxu0 0.0
      %1327 = vmatprep.subr.mxu0 0.0
      %1328 = vmatpush1.msra.mxu0 0.0
      %1329 = vmatprep.mubr.f32.mxu0 0.0
      %1330 = vmatmul.mubr.f32.gmra.mrb[0].mxu0 %v1186
      %v1331 = vpop.f32.mrb[0].mxu0
      %v1332 = vadd.f32 0.0, %v1331
      %v1333 = vpop.f32.mrb[0].mxu0
      %1334 = vdwg.mxu0
      %v1335 = vadd.f32 %v1182, %v1332
      %v1336 = vxor.u32 %v1335, 2147483648
      %v1337 = vmul.f32 %v1336, 1.442695
      %v1338 = vpow.pop %v1337
      %v1339 = vadd.f32 %v1338, 1.0
      %v1340 = vrcp.pop %v1339
      %v1341 = vmul.f32 1.0, %v1340
      %1342 = vmatprep.subr.mxu0 0.0
      %1343 = vmatpush1.msra.mxu0 %v216
      %1344 = vmatprep.subr.mxu0 0.0
      %1345 = vmatpush1.msra.mxu0 %v217
      %1346 = vmatprep.subr.mxu0 0.0
      %1347 = vmatpush1.msra.mxu0 %v218
      %1348 = vmatprep.subr.mxu0 0.0
      %1349 = vmatpush1.msra.mxu0 %v219
      %1350 = vmatprep.subr.mxu0 0.0
      %1351 = vmatpush1.msra.mxu0 0.0
      %1352 = vmatprep.subr.mxu0 0.0
      %1353 = vmatpush1.msra.mxu0 0.0
      %1354 = vmatprep.subr.mxu0 0.0
      %1355 = vmatpush1.msra.mxu0 0.0
      %1356 = vmatprep.subr.mxu0 0.0
      %1357 = vmatpush1.msra.mxu0 0.0
      %1358 = vmatprep.subr.mxu0 0.0
      %1359 = vmatpush1.msra.mxu0 0.0
      %1360 = vmatprep.subr.mxu0 0.0
      %1361 = vmatpush1.msra.mxu0 0.0
      %1362 = vmatprep.subr.mxu0 0.0
      %1363 = vmatpush1.msra.mxu0 0.0
      %1364 = vmatprep.subr.mxu0 0.0
      %1365 = vmatpush1.msra.mxu0 0.0
      %1366 = vmatprep.subr.mxu0 0.0
      %1367 = vmatpush1.msra.mxu0 0.0
      %1368 = vmatprep.subr.mxu0 0.0
      %1369 = vmatpush1.msra.mxu0 0.0
      %1370 = vmatprep.subr.mxu0 0.0
      %1371 = vmatpush1.msra.mxu0 0.0
      %1372 = vmatprep.subr.mxu0 0.0
      %1373 = vmatpush1.msra.mxu0 0.0
      %1374 = vmatprep.subr.mxu0 0.0
      %1375 = vmatpush1.msra.mxu0 0.0
      %1376 = vmatprep.subr.mxu0 0.0
      %1377 = vmatpush1.msra.mxu0 0.0
      %1378 = vmatprep.subr.mxu0 0.0
      %1379 = vmatpush1.msra.mxu0 0.0
      %1380 = vmatprep.subr.mxu0 0.0
      %1381 = vmatpush1.msra.mxu0 0.0
      %1382 = vmatprep.subr.mxu0 0.0
      %1383 = vmatpush1.msra.mxu0 0.0
      %1384 = vmatprep.subr.mxu0 0.0
      %1385 = vmatpush1.msra.mxu0 0.0
      %1386 = vmatprep.subr.mxu0 0.0
      %1387 = vmatpush1.msra.mxu0 0.0
      %1388 = vmatprep.subr.mxu0 0.0
      %1389 = vmatpush1.msra.mxu0 0.0
      %1390 = vmatprep.subr.mxu0 0.0
      %1391 = vmatpush1.msra.mxu0 0.0
      %1392 = vmatprep.subr.mxu0 0.0
      %1393 = vmatpush1.msra.mxu0 0.0
      %1394 = vmatprep.subr.mxu0 0.0
      %1395 = vmatpush1.msra.mxu0 0.0
      %1396 = vmatprep.subr.mxu0 0.0
      %1397 = vmatpush1.msra.mxu0 0.0
      %1398 = vmatprep.subr.mxu0 0.0
      %1399 = vmatpush1.msra.mxu0 0.0
      %1400 = vmatprep.subr.mxu0 0.0
      %1401 = vmatpush1.msra.mxu0 0.0
      %1402 = vmatprep.subr.mxu0 0.0
      %1403 = vmatpush1.msra.mxu0 0.0
      %1404 = vmatprep.subr.mxu0 0.0
      %1405 = vmatpush1.msra.mxu0 0.0
      %1406 = vmatprep.mubr.f32.mxu0 0.0
      %1407 = vmatmul.mubr.f32.gmra.mrb[0].mxu0 %v1186
      %v1408 = vpop.f32.mrb[0].mxu0
      %v1409 = vadd.f32 0.0, %v1408
      %v1410 = vpop.f32.mrb[0].mxu0
      %1411 = vdwg.mxu0
      %v1412 = vadd.f32 %v1183, %v1409
      %v1413 = vtanh.pop %v1412
      %1414 = vmatprep.subr.mxu0 0.0
      %1415 = vmatpush1.msra.mxu0 %v221
      %1416 = vmatprep.subr.mxu0 0.0
      %1417 = vmatpush1.msra.mxu0 %v222
      %1418 = vmatprep.subr.mxu0 0.0
      %1419 = vmatpush1.msra.mxu0 %v223
      %1420 = vmatprep.subr.mxu0 0.0
      %1421 = vmatpush1.msra.mxu0 %v224
      %1422 = vmatprep.subr.mxu0 0.0
      %1423 = vmatpush1.msra.mxu0 0.0
      %1424 = vmatprep.subr.mxu0 0.0
      %1425 = vmatpush1.msra.mxu0 0.0
      %1426 = vmatprep.subr.mxu0 0.0
      %1427 = vmatpush1.msra.mxu0 0.0
      %1428 = vmatprep.subr.mxu0 0.0
      %1429 = vmatpush1.msra.mxu0 0.0
      %1430 = vmatprep.subr.mxu0 0.0
      %1431 = vmatpush1.msra.mxu0 0.0
      %1432 = vmatprep.subr.mxu0 0.0
      %1433 = vmatpush1.msra.mxu0 0.0
      %1434 = vmatprep.subr.mxu0 0.0
      %1435 = vmatpush1.msra.mxu0 0.0
      %1436 = vmatprep.subr.mxu0 0.0
      %1437 = vmatpush1.msra.mxu0 0.0
      %1438 = vmatprep.subr.mxu0 0.0
      %1439 = vmatpush1.msra.mxu0 0.0
      %1440 = vmatprep.subr.mxu0 0.0
      %1441 = vmatpush1.msra.mxu0 0.0
      %1442 = vmatprep.subr.mxu0 0.0
      %1443 = vmatpush1.msra.mxu0 0.0
      %1444 = vmatprep.subr.mxu0 0.0
      %1445 = vmatpush1.msra.mxu0 0.0
      %1446 = vmatprep.subr.mxu0 0.0
      %1447 = vmatpush1.msra.mxu0 0.0
      %1448 = vmatprep.subr.mxu0 0.0
      %1449 = vmatpush1.msra.mxu0 0.0
      %1450 = vmatprep.subr.mxu0 0.0
      %1451 = vmatpush1.msra.mxu0 0.0
      %1452 = vmatprep.subr.mxu0 0.0
      %1453 = vmatpush1.msra.mxu0 0.0
      %1454 = vmatprep.subr.mxu0 0.0
      %1455 = vmatpush1.msra.mxu0 0.0
      %1456 = vmatprep.subr.mxu0 0.0
      %1457 = vmatpush1.msra.mxu0 0.0
      %1458 = vmatprep.subr.mxu0 0.0
      %1459 = vmatpush1.msra.mxu0 0.0
      %1460 = vmatprep.subr.mxu0 0.0
      %1461 = vmatpush1.msra.mxu0 0.0
      %1462 = vmatprep.subr.mxu0 0.0
      %1463 = vmatpush1.msra.mxu0 0.0
      %1464 = vmatprep.subr.mxu0 0.0
      %1465 = vmatpush1.msra.mxu0 0.0
      %1466 = vmatprep.subr.mxu0 0.0
      %1467 = vmatpush1.msra.mxu0 0.0
      %1468 = vmatprep.subr.mxu0 0.0
      %1469 = vmatpush1.msra.mxu0 0.0
      %1470 = vmatprep.subr.mxu0 0.0
      %1471 = vmatpush1.msra.mxu0 0.0
      %1472 = vmatprep.subr.mxu0 0.0
      %1473 = vmatpush1.msra.mxu0 0.0
      %1474 = vmatprep.subr.mxu0 0.0
      %1475 = vmatpush1.msra.mxu0 0.0
      %1476 = vmatprep.subr.mxu0 0.0
      %1477 = vmatpush1.msra.mxu0 0.0
      %1478 = vmatprep.mubr.f32.mxu0 0.0
      %1479 = vmatmul.mubr.f32.gmra.mrb[0].mxu0 %v1186
      %v1480 = vpop.f32.mrb[0].mxu0
      %v1481 = vadd.f32 0.0, %v1480
      %v1482 = vpop.f32.mrb[0].mxu0
      %1483 = vdwg.mxu0
      %v1484 = vadd.f32 %v1184, %v1481
      %v1485 = vxor.u32 %v1484, 2147483648
      %v1486 = vmul.f32 %v1485, 1.442695
      %v1487 = vpow.pop %v1486
      %v1488 = vadd.f32 %v1487, 1.0
      %v1489 = vrcp.pop %v1488
      %v1490 = vmul.f32 1.0, %v1489
      %v1491 = vmul.f32 %v1341, %v1175
      %v1492 = vmul.f32 %v1264, %v1413
      %v1493 = vadd.f32 %v1491, %v1492
      %v1494 = vtanh.pop %v1493
      %v1495 = vmul.f32 %v1490, %v1494
      %s1496 = scalar_lea.vmem %s197, 24
      %1497 = vst.msk [vmem:[%s1496] sm:$0xff] %vm231, %v1495
      %1498 = vst.msk [vmem:[#allocation2] sm:$0xff] %vm231, %v1495
      %1499 = vst.msk [vmem:[#allocation3] sm:$0xff] %vm231, %v1493
      %p1500 = scmp.eq.s32.totalorder %s16, 1
      // Predicated region
      $region33: #{wdlstm_forward.1} parent=27 // pred_check
        %p1501 = pneg %p1500
      $region34: #{wdlstm_forward.1} parent=27 // pred_check_branch
        %1503 = sbr.rel (%p1501) target = $region36
      $region35: #{wdlstm_forward.1} parent=27 // pred_region
        %1504 = vst.msk [vmem:[%s3] sm:$0xff] %vm231, %v1495
        %1505 = vst.msk [vmem:[%s4] sm:$0xff] %vm231, %v1493
      $region36: #{wdlstm_forward.1} parent=27 // pred_fallthru
        _
      %s1506 = smul.u32 4, %s16
      %p1507 = scmp.lt.s32.totalorder %s1506, 7
      %s1508 = scalar_select %p1507, %s1506, 7
      %s1509 = smul.addr %s1508, 8
      %s1510 = scalar_lea.vmem %s2, %s1509
      // Predicated region
      $region37: #{wdlstm_forward.1} parent=27 // pred_check
        %p1511 = pneg %p81
      $region38: #{wdlstm_forward.1} parent=27 // pred_check_branch
        %1513 = sbr.rel (%p1511) target = $region40
      $region39: #{wdlstm_forward.1} parent=27 // pred_region
        %s1514 = smul.u32 4, %s16
      $region40: #{wdlstm_forward.1} parent=27 // pred_fallthru
        _
      // Predicated region
      $region41: #{wdlstm_forward.1} parent=27 // pred_check
        %p1515 = pneg %p102
      $region42: #{wdlstm_forward.1} parent=27 // pred_check_branch
        %1517 = sbr.rel (%p1515) target = $region44
      $region43: #{wdlstm_forward.1} parent=27 // pred_region
        _
      $region44: #{wdlstm_forward.1} parent=27 // pred_fallthru
        _
      // Predicated region
      $region45: #{wdlstm_forward.1} parent=27 // pred_check
        %p1518 = pneg %p123
      $region46: #{wdlstm_forward.1} parent=27 // pred_check_branch
        %1520 = sbr.rel (%p1518) target = $region48
      $region47: #{wdlstm_forward.1} parent=27 // pred_region
        _
      $region48: #{wdlstm_forward.1} parent=27 // pred_fallthru
        _
      // Predicated region
      $region49: #{wdlstm_forward.1} parent=27 // pred_check
        %p1521 = pneg %p102
      $region50: #{wdlstm_forward.1} parent=27 // pred_check_branch
        %1523 = sbr.rel (%p1521) target = $region52
      $region51: #{wdlstm_forward.1} parent=27 // pred_region
        _
      $region52: #{wdlstm_forward.1} parent=27 // pred_fallthru
        _
      // Predicated region
      $region53: #{wdlstm_forward.1} parent=27 // pred_check
        %p1524 = pneg %p123
      $region54: #{wdlstm_forward.1} parent=27 // pred_check_branch
        %1526 = sbr.rel (%p1524) target = $region56
      $region55: #{wdlstm_forward.1} parent=27 // pred_region
        _
      $region56: #{wdlstm_forward.1} parent=27 // pred_fallthru
        _
    $region28: #{wdlstm_forward.1} parent=5 // pred_fallthru
      _
    %p1527 = scmp.le.s32.totalorder 2, %s11
    // Predicated region
    $region57: #{wdlstm_forward.1} parent=5 // pred_check
      %p1528 = pneg %p1527
    $region58: #{wdlstm_forward.1} parent=5 // pred_check_branch
      %1530 = sbr.rel (%p1528) target = $region60
    $region59: #{wdlstm_forward.1} parent=5 // pred_region
      %s1531 = ssub.s32 %s11, 2
      // Predicated region
      $region61: #{wdlstm_forward.1} parent=59 // pred_check
        %p1532 = pneg %p87
      $region62: #{wdlstm_forward.1} parent=59 // pred_check_branch
        %1534 = sbr.rel (%p1532) target = $region64
      $region63: #{wdlstm_forward.1} parent=59 // pred_region
        %s1535 = smul.u32 4, %s17
        %p1536 = scmp.lt.s32.totalorder %s1535, 7
        %s1537 = scalar_select %p1536, %s1535, 7
        %s1538 = smul.addr %s1537, 8
        %s1539 = scalar_lea.vmem %s2, %s1538
      $region64: #{wdlstm_forward.1} parent=59 // pred_fallthru
        _
    $region60: #{wdlstm_forward.1} parent=5 // pred_fallthru
      _
  $region6: #{wdlstm_forward.1} parent=0 // loop_footer
    %s15 = sadd.s32 1, %s11
  $region7: #{wdlstm_forward.1} parent=0 // loop_footer_branch
    %10 = sbr.rel target = $region3
  $region8: #{wdlstm_forward.1} parent=0 // loop_exit
    _

</llo_original>
